<compile_context>
chip_gen: v7x
topology: tpu7x:2x2x1
jax: 0.10.0
libtpu: 0.0.40
codegen_flags: <defaults>
</compile_context>

<pallas_src>
import functools

import jax
import jax.numpy as jnp
from jax import lax
from jax.experimental import pallas as pl
from jax.experimental.pallas import tpu as pltpu


def lstm_kernel(gx0_ref, whh0_ref, w1_ref, b1_ref, wfc_ref, bfc_ref,
                out_ref, hh_ref, *, hidden_size):
    """2-layer LSTM recurrence + fc head, single kernel invocation.

    gx0_ref : (T, B, 4H)  precomputed x @ W_ih0 + (b_ih0 + b_hh0)
    whh0_ref: (H, 4H)     layer-0 recurrent weights (pre-transposed)
    w1_ref  : (2H, 4H)    stacked [W_ih1; W_hh1] (pre-transposed)
    b1_ref  : (1, 4H)     folded layer-1 bias
    wfc_ref : (1, H)      fc weights as a lane row (output_size == 1)
    bfc_ref : (1, O)      fc bias
    out_ref : (B, O)
    hh_ref  : (B, 2H)     VMEM scratch holding [h0 | h1] for the fused matmul
    """
    T, B, _ = gx0_ref.shape
    H = hidden_size
    O = out_ref.shape[-1]

    whh0 = whh0_ref[...]
    w1 = w1_ref[...]
    # Hoist the bias broadcast out of the recurrence (JAX does not CSE
    # broadcast_in_dim; doing this per step re-emits it T times).
    b1 = jnp.broadcast_to(b1_ref[...], (B, 4 * H))

    def gate_act(gates, c):
        # Full-width activations: two EUP pushes over the whole (B, 4H) tile,
        # then a single round of lane slicing (gate order i, f, g, o).
        sig = jax.nn.sigmoid(gates)
        th = jnp.tanh(gates)
        i = sig[:, 0 * H:1 * H]
        f = sig[:, 1 * H:2 * H]
        g = th[:, 2 * H:3 * H]
        o = sig[:, 3 * H:4 * H]
        c_new = f * c + i * g
        h_new = o * jnp.tanh(c_new)
        return h_new, c_new

    def step(t, carry):
        h0, c0, h1, c1 = carry
        # Layer 0: input projection precomputed outside the kernel; only the
        # recurrent matmul remains on the serial chain.
        gates0 = gx0_ref[t] + jnp.dot(h0, whh0,
                                      preferred_element_type=jnp.float32)
        h0, c0 = gate_act(gates0, c0)
        # Layer 1: single fused matmul  [h0 | h1] @ [W_ih1; W_hh1].
        hh_ref[:, 0 * H:1 * H] = h0
        hh_ref[:, 1 * H:2 * H] = h1
        gates1 = jnp.dot(hh_ref[...], w1,
                         preferred_element_type=jnp.float32) + b1
        h1, c1 = gate_act(gates1, c1)
        return (h0, c0, h1, c1)

    zeros = jnp.zeros((B, H), jnp.float32)
    carry = (zeros, zeros, zeros, zeros)
    # Fully unroll the (short, static) time loop so layer-1(t) and the
    # data-independent layer-0(t+1) can overlap on the MXU/EUP.  For large T,
    # switch to lax.fori_loop(..., unroll=k) or a T-chunked grid.
    for t in range(T):
        carry = step(t, carry)
    _, _, h1, _ = carry

    # Dropout(0.2) is identity at eval time; fc applied to last-step hidden.
    if O == 1:
        # Replace the degenerate N=1 MXU matmul with a lane reduction.
        out_ref[...] = (jnp.sum(h1 * wfc_ref[...], axis=-1, keepdims=True)
                        + bfc_ref[...])
    else:
        out_ref[...] = (jnp.dot(h1, wfc_ref[...],
                                preferred_element_type=jnp.float32)
                        + bfc_ref[...])


def init_params(key, input_size, hidden_size, output_size):
    """Deterministic init mimicking PyTorch default U(-1/sqrt(H), 1/sqrt(H))."""
    H = hidden_size
    k_lstm = 1.0 / jnp.sqrt(jnp.float32(H))
    k_fc = 1.0 / jnp.sqrt(jnp.float32(H))
    keys = jax.random.split(key, 10)

    def u(k, shape, bound):
        return jax.random.uniform(k, shape, jnp.float32, -bound, bound)

    params = dict(
        # layer 0
        w_ih0=u(keys[0], (4 * H, input_size), k_lstm),
        w_hh0=u(keys[1], (4 * H, H), k_lstm),
        b_ih0=u(keys[2], (4 * H,), k_lstm),
        b_hh0=u(keys[3], (4 * H,), k_lstm),
        # layer 1 (input is layer-0 hidden)
        w_ih1=u(keys[4], (4 * H, H), k_lstm),
        w_hh1=u(keys[5], (4 * H, H), k_lstm),
        b_ih1=u(keys[6], (4 * H,), k_lstm),
        b_hh1=u(keys[7], (4 * H,), k_lstm),
        # fc head
        w_fc=u(keys[8], (output_size, H), k_fc),
        b_fc=u(keys[9], (output_size,), k_fc),
    )
    return params


def prepare_kernel_params(params, output_size):
    """One-time (outside the jitted forward) weight transposes / stacking."""
    H = params["w_hh0"].shape[1]
    prepped = dict(
        wih0_t=params["w_ih0"].T,                                   # (I, 4H)
        b0=(params["b_ih0"] + params["b_hh0"]).reshape(1, 4 * H),   # (1, 4H)
        whh0_t=params["w_hh0"].T,                                   # (H, 4H)
        w1=jnp.concatenate([params["w_ih1"].T, params["w_hh1"].T],
                           axis=0),                                 # (2H, 4H)
        b1=(params["b_ih1"] + params["b_hh1"]).reshape(1, 4 * H),   # (1, 4H)
        bfc=params["b_fc"].reshape(1, output_size),                 # (1, O)
    )
    if output_size == 1:
        prepped["wfc"] = params["w_fc"].reshape(1, H)               # (1, H)
    else:
        prepped["wfc"] = params["w_fc"].T                           # (H, O)
    return {k: jnp.asarray(v, jnp.float32) for k, v in prepped.items()}


@functools.partial(jax.jit, static_argnames=("hidden_size", "output_size"))
def lstm_forward(x, prepped, hidden_size, output_size):
    """x: (B, T, I) float32  ->  (B, output_size) float32."""
    B, T, I = x.shape
    H = hidden_size

    x_tm = jnp.transpose(x, (1, 0, 2)).astype(jnp.float32)          # (T, B, I)
    # Hoisted layer-0 input projection for ALL timesteps in one matmul,
    # with the folded layer-0 bias already added.
    gx0 = (x_tm.reshape(T * B, I) @ prepped["wih0_t"]
           + prepped["b0"]).reshape(T, B, 4 * H)

    kernel = functools.partial(lstm_kernel, hidden_size=H)
    out = pl.pallas_call(
        kernel,
        out_shape=jax.ShapeDtypeStruct((B, output_size), jnp.float32),
        in_specs=[pl.BlockSpec(memory_space=pltpu.MemorySpace.VMEM)] * 6,
        out_specs=pl.BlockSpec(memory_space=pltpu.MemorySpace.VMEM),
        scratch_shapes=[pltpu.VMEM((B, 2 * H), jnp.float32)],
    )(gx0, prepped["whh0_t"], prepped["w1"], prepped["b1"],
      prepped["wfc"], prepped["bfc"])
    return out


def lstm_reference(x, params, hidden_size, output_size):
    """Pure-JAX reference matching torch.nn.LSTM (2 layers) + Linear."""
    B, T, I = x.shape
    H = hidden_size

    def cell(x_t, h, c, w_ih, w_hh, b_ih, b_hh):
        gates = x_t @ w_ih.T + b_ih + h @ w_hh.T + b_hh
        i = jax.nn.sigmoid(gates[:, 0 * H:1 * H])
        f = jax.nn.sigmoid(gates[:, 1 * H:2 * H])
        g = jnp.tanh(gates[:, 2 * H:3 * H])
        o = jax.nn.sigmoid(gates[:, 3 * H:4 * H])
        c_new = f * c + i * g
        return o * jnp.tanh(c_new), c_new

    h0 = c0 = h1 = c1 = jnp.zeros((B, H), jnp.float32)
    for t in range(T):
        x_t = x[:, t, :]
        h0, c0 = cell(x_t, h0, c0, params["w_ih0"], params["w_hh0"],
                      params["b_ih0"], params["b_hh0"])
        h1, c1 = cell(h0, h1, c1, params["w_ih1"], params["w_hh1"],
                      params["b_ih1"], params["b_hh1"])
    return h1 @ params["w_fc"].T + params["b_fc"]


if __name__ == "__main__":
    # Small shapes consistent with the module: (batch, seq, input_size=1).
    batch, seq = 2, 8
    input_size, hidden_size, output_size = 1, 32, 1

    key = jax.random.PRNGKey(0)
    k_x, k_p = jax.random.split(key)
    x = jax.random.normal(k_x, (batch, seq, input_size), jnp.float32)
    params = init_params(k_p, input_size, hidden_size, output_size)

    # Weight prep happens once, outside the jitted forward.
    prepped = prepare_kernel_params(params, output_size)

    out = lstm_forward(x, prepped, hidden_size, output_size)
    out = jax.block_until_ready(out)

    ref = lstm_reference(x, params, hidden_size, output_size)
    assert out.shape == (batch, output_size)
    assert jnp.allclose(out, ref, atol=1e-5, rtol=1e-5), (out, ref)

    print("KERNEL_OK")
</pallas_src>

<mosaic_0001>
module attributes {stable_mosaic.version = 11 : i64} {
  func.func @lstm_kernel(%arg0: memref<8x2x128xf32, #tpu.memory_space<vmem>>, %arg1: memref<32x128xf32, #tpu.memory_space<vmem>>, %arg2: memref<64x128xf32, #tpu.memory_space<vmem>>, %arg3: memref<1x128xf32, #tpu.memory_space<vmem>>, %arg4: memref<1x32xf32, #tpu.memory_space<vmem>>, %arg5: memref<1x1xf32, #tpu.memory_space<vmem>>, %arg6: memref<2x1xf32, #tpu.memory_space<vmem>>, %arg7: memref<2x64xf32, #tpu.memory_space<vmem>>) attributes {dimension_semantics = [], scalar_prefetch = 0 : i64, scratch_operands = 1 : i64, tpu.core_type = #tpu.core_type<tc>} {
    %c0 = arith.constant 0 : index
    %c0_0 = arith.constant 0 : index
    %0 = vector.load %arg1[%c0, %c0_0] : memref<32x128xf32, #tpu.memory_space<vmem>>, vector<32x128xf32>
    %c0_1 = arith.constant 0 : index
    %c0_2 = arith.constant 0 : index
    %1 = vector.load %arg2[%c0_1, %c0_2] : memref<64x128xf32, #tpu.memory_space<vmem>>, vector<64x128xf32>
    %c0_3 = arith.constant 0 : index
    %c0_4 = arith.constant 0 : index
    %2 = vector.load %arg3[%c0_3, %c0_4] : memref<1x128xf32, #tpu.memory_space<vmem>>, vector<1x128xf32>
    %3 = vector.shape_cast %2 : vector<1x128xf32> to vector<1x128xf32>
    %4 = vector.broadcast %3 : vector<1x128xf32> to vector<2x128xf32>
    %cst = arith.constant 0.000000e+00 : f32
    %5 = vector.broadcast %cst : f32 to vector<2x32xf32>
    %c0_5 = arith.constant 0 : index
    %c0_6 = arith.constant 0 : index
    %c0_7 = arith.constant 0 : index
    %6 = vector.load %arg0[%c0_5, %c0_6, %c0_7] : memref<8x2x128xf32, #tpu.memory_space<vmem>>, vector<1x2x128xf32>
    %7 = vector.shape_cast %6 : vector<1x2x128xf32> to vector<2x128xf32>
    %cst_8 = arith.constant dense<0.000000e+00> : vector<2x128xf32>
    %8 = tpu.matmul %5, %0, %cst_8 {dimension_numbers = #tpu.dot_dimension_numbers<[1], [0], [0], [1], [0, 0, 1, 1], [], []>} : vector<2x32xf32>, vector<32x128xf32>, vector<2x128xf32> -> vector<2x128xf32>
    %9 = arith.addf %7, %8 : vector<2x128xf32>
    %10 = arith.negf %9 : vector<2x128xf32>
    %11 = math.exp %10 : vector<2x128xf32>
    %cst_9 = arith.constant 1.000000e+00 : f32
    %12 = vector.broadcast %cst_9 : f32 to vector<2x128xf32>
    %13 = arith.addf %12, %11 : vector<2x128xf32>
    %14 = arith.divf %12, %13 : vector<2x128xf32>
    %15 = math.tanh %9 : vector<2x128xf32>
    %16 = vector.extract_strided_slice %14 {offsets = [0, 0], sizes = [2, 32], strides = [1, 1]} : vector<2x128xf32> to vector<2x32xf32>
    %17 = vector.extract_strided_slice %14 {offsets = [0, 32], sizes = [2, 32], strides = [1, 1]} : vector<2x128xf32> to vector<2x32xf32>
    %18 = vector.extract_strided_slice %15 {offsets = [0, 64], sizes = [2, 32], strides = [1, 1]} : vector<2x128xf32> to vector<2x32xf32>
    %19 = vector.extract_strided_slice %14 {offsets = [0, 96], sizes = [2, 32], strides = [1, 1]} : vector<2x128xf32> to vector<2x32xf32>
    %20 = arith.mulf %17, %5 : vector<2x32xf32>
    %21 = arith.mulf %16, %18 : vector<2x32xf32>
    %22 = arith.addf %20, %21 : vector<2x32xf32>
    %23 = math.tanh %22 : vector<2x32xf32>
    %24 = arith.mulf %19, %23 : vector<2x32xf32>
    %c0_10 = arith.constant 0 : index
    %c0_11 = arith.constant 0 : index
    %25 = vector.load %arg7[%c0_10, %c0_11] : memref<2x64xf32, #tpu.memory_space<vmem>>, vector<2x32xf32>
    tpu.vector_store %arg7[%c0_10, %c0_11], %24 {strides = array<i32>} : memref<2x64xf32, #tpu.memory_space<vmem>>, vector<2x32xf32>,
    %c0_12 = arith.constant 0 : index
    %c32 = arith.constant 32 : index
    %26 = vector.load %arg7[%c0_12, %c32] : memref<2x64xf32, #tpu.memory_space<vmem>>, vector<2x32xf32>
    tpu.vector_store %arg7[%c0_12, %c32], %5 {strides = array<i32>} : memref<2x64xf32, #tpu.memory_space<vmem>>, vector<2x32xf32>,
    %c0_13 = arith.constant 0 : index
    %c0_14 = arith.constant 0 : index
    %27 = vector.load %arg7[%c0_13, %c0_14] : memref<2x64xf32, #tpu.memory_space<vmem>>, vector<2x64xf32>
    %cst_15 = arith.constant dense<0.000000e+00> : vector<2x128xf32>
    %28 = tpu.matmul %27, %1, %cst_15 {dimension_numbers = #tpu.dot_dimension_numbers<[1], [0], [0], [1], [0, 0, 1, 1], [], []>} : vector<2x64xf32>, vector<64x128xf32>, vector<2x128xf32> -> vector<2x128xf32>
    %29 = arith.addf %28, %4 : vector<2x128xf32>
    %30 = arith.negf %29 : vector<2x128xf32>
    %31 = math.exp %30 : vector<2x128xf32>
    %cst_16 = arith.constant 1.000000e+00 : f32
    %32 = vector.broadcast %cst_16 : f32 to vector<2x128xf32>
    %33 = arith.addf %32, %31 : vector<2x128xf32>
    %34 = arith.divf %32, %33 : vector<2x128xf32>
    %35 = math.tanh %29 : vector<2x128xf32>
    %36 = vector.extract_strided_slice %34 {offsets = [0, 0], sizes = [2, 32], strides = [1, 1]} : vector<2x128xf32> to vector<2x32xf32>
    %37 = vector.extract_strided_slice %34 {offsets = [0, 32], sizes = [2, 32], strides = [1, 1]} : vector<2x128xf32> to vector<2x32xf32>
    %38 = vector.extract_strided_slice %35 {offsets = [0, 64], sizes = [2, 32], strides = [1, 1]} : vector<2x128xf32> to vector<2x32xf32>
    %39 = vector.extract_strided_slice %34 {offsets = [0, 96], sizes = [2, 32], strides = [1, 1]} : vector<2x128xf32> to vector<2x32xf32>
    %40 = arith.mulf %37, %5 : vector<2x32xf32>
    %41 = arith.mulf %36, %38 : vector<2x32xf32>
    %42 = arith.addf %40, %41 : vector<2x32xf32>
    %43 = math.tanh %42 : vector<2x32xf32>
    %44 = arith.mulf %39, %43 : vector<2x32xf32>
    %c1 = arith.constant 1 : index
    %c0_17 = arith.constant 0 : index
    %c0_18 = arith.constant 0 : index
    %45 = vector.load %arg0[%c1, %c0_17, %c0_18] : memref<8x2x128xf32, #tpu.memory_space<vmem>>, vector<1x2x128xf32>
    %46 = vector.shape_cast %45 : vector<1x2x128xf32> to vector<2x128xf32>
    %cst_19 = arith.constant dense<0.000000e+00> : vector<2x128xf32>
    %47 = tpu.matmul %24, %0, %cst_19 {dimension_numbers = #tpu.dot_dimension_numbers<[1], [0], [0], [1], [0, 0, 1, 1], [], []>} : vector<2x32xf32>, vector<32x128xf32>, vector<2x128xf32> -> vector<2x128xf32>
    %48 = arith.addf %46, %47 : vector<2x128xf32>
    %49 = arith.negf %48 : vector<2x128xf32>
    %50 = math.exp %49 : vector<2x128xf32>
    %cst_20 = arith.constant 1.000000e+00 : f32
    %51 = vector.broadcast %cst_20 : f32 to vector<2x128xf32>
    %52 = arith.addf %51, %50 : vector<2x128xf32>
    %53 = arith.divf %51, %52 : vector<2x128xf32>
    %54 = math.tanh %48 : vector<2x128xf32>
    %55 = vector.extract_strided_slice %53 {offsets = [0, 0], sizes = [2, 32], strides = [1, 1]} : vector<2x128xf32> to vector<2x32xf32>
    %56 = vector.extract_strided_slice %53 {offsets = [0, 32], sizes = [2, 32], strides = [1, 1]} : vector<2x128xf32> to vector<2x32xf32>
    %57 = vector.extract_strided_slice %54 {offsets = [0, 64], sizes = [2, 32], strides = [1, 1]} : vector<2x128xf32> to vector<2x32xf32>
    %58 = vector.extract_strided_slice %53 {offsets = [0, 96], sizes = [2, 32], strides = [1, 1]} : vector<2x128xf32> to vector<2x32xf32>
    %59 = arith.mulf %56, %22 : vector<2x32xf32>
    %60 = arith.mulf %55, %57 : vector<2x32xf32>
    %61 = arith.addf %59, %60 : vector<2x32xf32>
    %62 = math.tanh %61 : vector<2x32xf32>
    %63 = arith.mulf %58, %62 : vector<2x32xf32>
    %c0_21 = arith.constant 0 : index
    %c0_22 = arith.constant 0 : index
    %64 = vector.load %arg7[%c0_21, %c0_22] : memref<2x64xf32, #tpu.memory_space<vmem>>, vector<2x32xf32>
    tpu.vector_store %arg7[%c0_21, %c0_22], %63 {strides = array<i32>} : memref<2x64xf32, #tpu.memory_space<vmem>>, vector<2x32xf32>,
    %c0_23 = arith.constant 0 : index
    %c32_24 = arith.constant 32 : index
    %65 = vector.load %arg7[%c0_23, %c32_24] : memref<2x64xf32, #tpu.memory_space<vmem>>, vector<2x32xf32>
    tpu.vector_store %arg7[%c0_23, %c32_24], %44 {strides = array<i32>} : memref<2x64xf32, #tpu.memory_space<vmem>>, vector<2x32xf32>,
    %c0_25 = arith.constant 0 : index
    %c0_26 = arith.constant 0 : index
    %66 = vector.load %arg7[%c0_25, %c0_26] : memref<2x64xf32, #tpu.memory_space<vmem>>, vector<2x64xf32>
    %cst_27 = arith.constant dense<0.000000e+00> : vector<2x128xf32>
    %67 = tpu.matmul %66, %1, %cst_27 {dimension_numbers = #tpu.dot_dimension_numbers<[1], [0], [0], [1], [0, 0, 1, 1], [], []>} : vector<2x64xf32>, vector<64x128xf32>, vector<2x128xf32> -> vector<2x128xf32>
    %68 = arith.addf %67, %4 : vector<2x128xf32>
    %69 = arith.negf %68 : vector<2x128xf32>
    %70 = math.exp %69 : vector<2x128xf32>
    %cst_28 = arith.constant 1.000000e+00 : f32
    %71 = vector.broadcast %cst_28 : f32 to vector<2x128xf32>
    %72 = arith.addf %71, %70 : vector<2x128xf32>
    %73 = arith.divf %71, %72 : vector<2x128xf32>
    %74 = math.tanh %68 : vector<2x128xf32>
    %75 = vector.extract_strided_slice %73 {offsets = [0, 0], sizes = [2, 32], strides = [1, 1]} : vector<2x128xf32> to vector<2x32xf32>
    %76 = vector.extract_strided_slice %73 {offsets = [0, 32], sizes = [2, 32], strides = [1, 1]} : vector<2x128xf32> to vector<2x32xf32>
    %77 = vector.extract_strided_slice %74 {offsets = [0, 64], sizes = [2, 32], strides = [1, 1]} : vector<2x128xf32> to vector<2x32xf32>
    %78 = vector.extract_strided_slice %73 {offsets = [0, 96], sizes = [2, 32], strides = [1, 1]} : vector<2x128xf32> to vector<2x32xf32>
    %79 = arith.mulf %76, %42 : vector<2x32xf32>
    %80 = arith.mulf %75, %77 : vector<2x32xf32>
    %81 = arith.addf %79, %80 : vector<2x32xf32>
    %82 = math.tanh %81 : vector<2x32xf32>
    %83 = arith.mulf %78, %82 : vector<2x32xf32>
    %c2 = arith.constant 2 : index
    %c0_29 = arith.constant 0 : index
    %c0_30 = arith.constant 0 : index
    %84 = vector.load %arg0[%c2, %c0_29, %c0_30] : memref<8x2x128xf32, #tpu.memory_space<vmem>>, vector<1x2x128xf32>
    %85 = vector.shape_cast %84 : vector<1x2x128xf32> to vector<2x128xf32>
    %cst_31 = arith.constant dense<0.000000e+00> : vector<2x128xf32>
    %86 = tpu.matmul %63, %0, %cst_31 {dimension_numbers = #tpu.dot_dimension_numbers<[1], [0], [0], [1], [0, 0, 1, 1], [], []>} : vector<2x32xf32>, vector<32x128xf32>, vector<2x128xf32> -> vector<2x128xf32>
    %87 = arith.addf %85, %86 : vector<2x128xf32>
    %88 = arith.negf %87 : vector<2x128xf32>
    %89 = math.exp %88 : vector<2x128xf32>
    %cst_32 = arith.constant 1.000000e+00 : f32
    %90 = vector.broadcast %cst_32 : f32 to vector<2x128xf32>
    %91 = arith.addf %90, %89 : vector<2x128xf32>
    %92 = arith.divf %90, %91 : vector<2x128xf32>
    %93 = math.tanh %87 : vector<2x128xf32>
    %94 = vector.extract_strided_slice %92 {offsets = [0, 0], sizes = [2, 32], strides = [1, 1]} : vector<2x128xf32> to vector<2x32xf32>
    %95 = vector.extract_strided_slice %92 {offsets = [0, 32], sizes = [2, 32], strides = [1, 1]} : vector<2x128xf32> to vector<2x32xf32>
    %96 = vector.extract_strided_slice %93 {offsets = [0, 64], sizes = [2, 32], strides = [1, 1]} : vector<2x128xf32> to vector<2x32xf32>
    %97 = vector.extract_strided_slice %92 {offsets = [0, 96], sizes = [2, 32], strides = [1, 1]} : vector<2x128xf32> to vector<2x32xf32>
    %98 = arith.mulf %95, %61 : vector<2x32xf32>
    %99 = arith.mulf %94, %96 : vector<2x32xf32>
    %100 = arith.addf %98, %99 : vector<2x32xf32>
    %101 = math.tanh %100 : vector<2x32xf32>
    %102 = arith.mulf %97, %101 : vector<2x32xf32>
    %c0_33 = arith.constant 0 : index
    %c0_34 = arith.constant 0 : index
    %103 = vector.load %arg7[%c0_33, %c0_34] : memref<2x64xf32, #tpu.memory_space<vmem>>, vector<2x32xf32>
    tpu.vector_store %arg7[%c0_33, %c0_34], %102 {strides = array<i32>} : memref<2x64xf32, #tpu.memory_space<vmem>>, vector<2x32xf32>,
    %c0_35 = arith.constant 0 : index
    %c32_36 = arith.constant 32 : index
    %104 = vector.load %arg7[%c0_35, %c32_36] : memref<2x64xf32, #tpu.memory_space<vmem>>, vector<2x32xf32>
    tpu.vector_store %arg7[%c0_35, %c32_36], %83 {strides = array<i32>} : memref<2x64xf32, #tpu.memory_space<vmem>>, vector<2x32xf32>,
    %c0_37 = arith.constant 0 : index
    %c0_38 = arith.constant 0 : index
    %105 = vector.load %arg7[%c0_37, %c0_38] : memref<2x64xf32, #tpu.memory_space<vmem>>, vector<2x64xf32>
    %cst_39 = arith.constant dense<0.000000e+00> : vector<2x128xf32>
    %106 = tpu.matmul %105, %1, %cst_39 {dimension_numbers = #tpu.dot_dimension_numbers<[1], [0], [0], [1], [0, 0, 1, 1], [], []>} : vector<2x64xf32>, vector<64x128xf32>, vector<2x128xf32> -> vector<2x128xf32>
    %107 = arith.addf %106, %4 : vector<2x128xf32>
    %108 = arith.negf %107 : vector<2x128xf32>
    %109 = math.exp %108 : vector<2x128xf32>
    %cst_40 = arith.constant 1.000000e+00 : f32
    %110 = vector.broadcast %cst_40 : f32 to vector<2x128xf32>
    %111 = arith.addf %110, %109 : vector<2x128xf32>
    %112 = arith.divf %110, %111 : vector<2x128xf32>
    %113 = math.tanh %107 : vector<2x128xf32>
    %114 = vector.extract_strided_slice %112 {offsets = [0, 0], sizes = [2, 32], strides = [1, 1]} : vector<2x128xf32> to vector<2x32xf32>
    %115 = vector.extract_strided_slice %112 {offsets = [0, 32], sizes = [2, 32], strides = [1, 1]} : vector<2x128xf32> to vector<2x32xf32>
    %116 = vector.extract_strided_slice %113 {offsets = [0, 64], sizes = [2, 32], strides = [1, 1]} : vector<2x128xf32> to vector<2x32xf32>
    %117 = vector.extract_strided_slice %112 {offsets = [0, 96], sizes = [2, 32], strides = [1, 1]} : vector<2x128xf32> to vector<2x32xf32>
    %118 = arith.mulf %115, %81 : vector<2x32xf32>
    %119 = arith.mulf %114, %116 : vector<2x32xf32>
    %120 = arith.addf %118, %119 : vector<2x32xf32>
    %121 = math.tanh %120 : vector<2x32xf32>
    %122 = arith.mulf %117, %121 : vector<2x32xf32>
    %c3 = arith.constant 3 : index
    %c0_41 = arith.constant 0 : index
    %c0_42 = arith.constant 0 : index
    %123 = vector.load %arg0[%c3, %c0_41, %c0_42] : memref<8x2x128xf32, #tpu.memory_space<vmem>>, vector<1x2x128xf32>
    %124 = vector.shape_cast %123 : vector<1x2x128xf32> to vector<2x128xf32>
    %cst_43 = arith.constant dense<0.000000e+00> : vector<2x128xf32>
    %125 = tpu.matmul %102, %0, %cst_43 {dimension_numbers = #tpu.dot_dimension_numbers<[1], [0], [0], [1], [0, 0, 1, 1], [], []>} : vector<2x32xf32>, vector<32x128xf32>, vector<2x128xf32> -> vector<2x128xf32>
    %126 = arith.addf %124, %125 : vector<2x128xf32>
    %127 = arith.negf %126 : vector<2x128xf32>
    %128 = math.exp %127 : vector<2x128xf32>
    %cst_44 = arith.constant 1.000000e+00 : f32
    %129 = vector.broadcast %cst_44 : f32 to vector<2x128xf32>
    %130 = arith.addf %129, %128 : vector<2x128xf32>
    %131 = arith.divf %129, %130 : vector<2x128xf32>
    %132 = math.tanh %126 : vector<2x128xf32>
    %133 = vector.extract_strided_slice %131 {offsets = [0, 0], sizes = [2, 32], strides = [1, 1]} : vector<2x128xf32> to vector<2x32xf32>
    %134 = vector.extract_strided_slice %131 {offsets = [0, 32], sizes = [2, 32], strides = [1, 1]} : vector<2x128xf32> to vector<2x32xf32>
    %135 = vector.extract_strided_slice %132 {offsets = [0, 64], sizes = [2, 32], strides = [1, 1]} : vector<2x128xf32> to vector<2x32xf32>
    %136 = vector.extract_strided_slice %131 {offsets = [0, 96], sizes = [2, 32], strides = [1, 1]} : vector<2x128xf32> to vector<2x32xf32>
    %137 = arith.mulf %134, %100 : vector<2x32xf32>
    %138 = arith.mulf %133, %135 : vector<2x32xf32>
    %139 = arith.addf %137, %138 : vector<2x32xf32>
    %140 = math.tanh %139 : vector<2x32xf32>
    %141 = arith.mulf %136, %140 : vector<2x32xf32>
    %c0_45 = arith.constant 0 : index
    %c0_46 = arith.constant 0 : index
    %142 = vector.load %arg7[%c0_45, %c0_46] : memref<2x64xf32, #tpu.memory_space<vmem>>, vector<2x32xf32>
    tpu.vector_store %arg7[%c0_45, %c0_46], %141 {strides = array<i32>} : memref<2x64xf32, #tpu.memory_space<vmem>>, vector<2x32xf32>,
    %c0_47 = arith.constant 0 : index
    %c32_48 = arith.constant 32 : index
    %143 = vector.load %arg7[%c0_47, %c32_48] : memref<2x64xf32, #tpu.memory_space<vmem>>, vector<2x32xf32>
    tpu.vector_store %arg7[%c0_47, %c32_48], %122 {strides = array<i32>} : memref<2x64xf32, #tpu.memory_space<vmem>>, vector<2x32xf32>,
    %c0_49 = arith.constant 0 : index
    %c0_50 = arith.constant 0 : index
    %144 = vector.load %arg7[%c0_49, %c0_50] : memref<2x64xf32, #tpu.memory_space<vmem>>, vector<2x64xf32>
    %cst_51 = arith.constant dense<0.000000e+00> : vector<2x128xf32>
    %145 = tpu.matmul %144, %1, %cst_51 {dimension_numbers = #tpu.dot_dimension_numbers<[1], [0], [0], [1], [0, 0, 1, 1], [], []>} : vector<2x64xf32>, vector<64x128xf32>, vector<2x128xf32> -> vector<2x128xf32>
    %146 = arith.addf %145, %4 : vector<2x128xf32>
    %147 = arith.negf %146 : vector<2x128xf32>
    %148 = math.exp %147 : vector<2x128xf32>
    %cst_52 = arith.constant 1.000000e+00 : f32
    %149 = vector.broadcast %cst_52 : f32 to vector<2x128xf32>
    %150 = arith.addf %149, %148 : vector<2x128xf32>
    %151 = arith.divf %149, %150 : vector<2x128xf32>
    %152 = math.tanh %146 : vector<2x128xf32>
    %153 = vector.extract_strided_slice %151 {offsets = [0, 0], sizes = [2, 32], strides = [1, 1]} : vector<2x128xf32> to vector<2x32xf32>
    %154 = vector.extract_strided_slice %151 {offsets = [0, 32], sizes = [2, 32], strides = [1, 1]} : vector<2x128xf32> to vector<2x32xf32>
    %155 = vector.extract_strided_slice %152 {offsets = [0, 64], sizes = [2, 32], strides = [1, 1]} : vector<2x128xf32> to vector<2x32xf32>
    %156 = vector.extract_strided_slice %151 {offsets = [0, 96], sizes = [2, 32], strides = [1, 1]} : vector<2x128xf32> to vector<2x32xf32>
    %157 = arith.mulf %154, %120 : vector<2x32xf32>
    %158 = arith.mulf %153, %155 : vector<2x32xf32>
    %159 = arith.addf %157, %158 : vector<2x32xf32>
    %160 = math.tanh %159 : vector<2x32xf32>
    %161 = arith.mulf %156, %160 : vector<2x32xf32>
    %c4 = arith.constant 4 : index
    %c0_53 = arith.constant 0 : index
    %c0_54 = arith.constant 0 : index
    %162 = vector.load %arg0[%c4, %c0_53, %c0_54] : memref<8x2x128xf32, #tpu.memory_space<vmem>>, vector<1x2x128xf32>
    %163 = vector.shape_cast %162 : vector<1x2x128xf32> to vector<2x128xf32>
    %cst_55 = arith.constant dense<0.000000e+00> : vector<2x128xf32>
    %164 = tpu.matmul %141, %0, %cst_55 {dimension_numbers = #tpu.dot_dimension_numbers<[1], [0], [0], [1], [0, 0, 1, 1], [], []>} : vector<2x32xf32>, vector<32x128xf32>, vector<2x128xf32> -> vector<2x128xf32>
    %165 = arith.addf %163, %164 : vector<2x128xf32>
    %166 = arith.negf %165 : vector<2x128xf32>
    %167 = math.exp %166 : vector<2x128xf32>
    %cst_56 = arith.constant 1.000000e+00 : f32
    %168 = vector.broadcast %cst_56 : f32 to vector<2x128xf32>
    %169 = arith.addf %168, %167 : vector<2x128xf32>
    %170 = arith.divf %168, %169 : vector<2x128xf32>
    %171 = math.tanh %165 : vector<2x128xf32>
    %172 = vector.extract_strided_slice %170 {offsets = [0, 0], sizes = [2, 32], strides = [1, 1]} : vector<2x128xf32> to vector<2x32xf32>
    %173 = vector.extract_strided_slice %170 {offsets = [0, 32], sizes = [2, 32], strides = [1, 1]} : vector<2x128xf32> to vector<2x32xf32>
    %174 = vector.extract_strided_slice %171 {offsets = [0, 64], sizes = [2, 32], strides = [1, 1]} : vector<2x128xf32> to vector<2x32xf32>
    %175 = vector.extract_strided_slice %170 {offsets = [0, 96], sizes = [2, 32], strides = [1, 1]} : vector<2x128xf32> to vector<2x32xf32>
    %176 = arith.mulf %173, %139 : vector<2x32xf32>
    %177 = arith.mulf %172, %174 : vector<2x32xf32>
    %178 = arith.addf %176, %177 : vector<2x32xf32>
    %179 = math.tanh %178 : vector<2x32xf32>
    %180 = arith.mulf %175, %179 : vector<2x32xf32>
    %c0_57 = arith.constant 0 : index
    %c0_58 = arith.constant 0 : index
    %181 = vector.load %arg7[%c0_57, %c0_58] : memref<2x64xf32, #tpu.memory_space<vmem>>, vector<2x32xf32>
    tpu.vector_store %arg7[%c0_57, %c0_58], %180 {strides = array<i32>} : memref<2x64xf32, #tpu.memory_space<vmem>>, vector<2x32xf32>,
    %c0_59 = arith.constant 0 : index
    %c32_60 = arith.constant 32 : index
    %182 = vector.load %arg7[%c0_59, %c32_60] : memref<2x64xf32, #tpu.memory_space<vmem>>, vector<2x32xf32>
    tpu.vector_store %arg7[%c0_59, %c32_60], %161 {strides = array<i32>} : memref<2x64xf32, #tpu.memory_space<vmem>>, vector<2x32xf32>,
    %c0_61 = arith.constant 0 : index
    %c0_62 = arith.constant 0 : index
    %183 = vector.load %arg7[%c0_61, %c0_62] : memref<2x64xf32, #tpu.memory_space<vmem>>, vector<2x64xf32>
    %cst_63 = arith.constant dense<0.000000e+00> : vector<2x128xf32>
    %184 = tpu.matmul %183, %1, %cst_63 {dimension_numbers = #tpu.dot_dimension_numbers<[1], [0], [0], [1], [0, 0, 1, 1], [], []>} : vector<2x64xf32>, vector<64x128xf32>, vector<2x128xf32> -> vector<2x128xf32>
    %185 = arith.addf %184, %4 : vector<2x128xf32>
    %186 = arith.negf %185 : vector<2x128xf32>
    %187 = math.exp %186 : vector<2x128xf32>
    %cst_64 = arith.constant 1.000000e+00 : f32
    %188 = vector.broadcast %cst_64 : f32 to vector<2x128xf32>
    %189 = arith.addf %188, %187 : vector<2x128xf32>
    %190 = arith.divf %188, %189 : vector<2x128xf32>
    %191 = math.tanh %185 : vector<2x128xf32>
    %192 = vector.extract_strided_slice %190 {offsets = [0, 0], sizes = [2, 32], strides = [1, 1]} : vector<2x128xf32> to vector<2x32xf32>
    %193 = vector.extract_strided_slice %190 {offsets = [0, 32], sizes = [2, 32], strides = [1, 1]} : vector<2x128xf32> to vector<2x32xf32>
    %194 = vector.extract_strided_slice %191 {offsets = [0, 64], sizes = [2, 32], strides = [1, 1]} : vector<2x128xf32> to vector<2x32xf32>
    %195 = vector.extract_strided_slice %190 {offsets = [0, 96], sizes = [2, 32], strides = [1, 1]} : vector<2x128xf32> to vector<2x32xf32>
    %196 = arith.mulf %193, %159 : vector<2x32xf32>
    %197 = arith.mulf %192, %194 : vector<2x32xf32>
    %198 = arith.addf %196, %197 : vector<2x32xf32>
    %199 = math.tanh %198 : vector<2x32xf32>
    %200 = arith.mulf %195, %199 : vector<2x32xf32>
    %c5 = arith.constant 5 : index
    %c0_65 = arith.constant 0 : index
    %c0_66 = arith.constant 0 : index
    %201 = vector.load %arg0[%c5, %c0_65, %c0_66] : memref<8x2x128xf32, #tpu.memory_space<vmem>>, vector<1x2x128xf32>
    %202 = vector.shape_cast %201 : vector<1x2x128xf32> to vector<2x128xf32>
    %cst_67 = arith.constant dense<0.000000e+00> : vector<2x128xf32>
    %203 = tpu.matmul %180, %0, %cst_67 {dimension_numbers = #tpu.dot_dimension_numbers<[1], [0], [0], [1], [0, 0, 1, 1], [], []>} : vector<2x32xf32>, vector<32x128xf32>, vector<2x128xf32> -> vector<2x128xf32>
    %204 = arith.addf %202, %203 : vector<2x128xf32>
    %205 = arith.negf %204 : vector<2x128xf32>
    %206 = math.exp %205 : vector<2x128xf32>
    %cst_68 = arith.constant 1.000000e+00 : f32
    %207 = vector.broadcast %cst_68 : f32 to vector<2x128xf32>
    %208 = arith.addf %207, %206 : vector<2x128xf32>
    %209 = arith.divf %207, %208 : vector<2x128xf32>
    %210 = math.tanh %204 : vector<2x128xf32>
    %211 = vector.extract_strided_slice %209 {offsets = [0, 0], sizes = [2, 32], strides = [1, 1]} : vector<2x128xf32> to vector<2x32xf32>
    %212 = vector.extract_strided_slice %209 {offsets = [0, 32], sizes = [2, 32], strides = [1, 1]} : vector<2x128xf32> to vector<2x32xf32>
    %213 = vector.extract_strided_slice %210 {offsets = [0, 64], sizes = [2, 32], strides = [1, 1]} : vector<2x128xf32> to vector<2x32xf32>
    %214 = vector.extract_strided_slice %209 {offsets = [0, 96], sizes = [2, 32], strides = [1, 1]} : vector<2x128xf32> to vector<2x32xf32>
    %215 = arith.mulf %212, %178 : vector<2x32xf32>
    %216 = arith.mulf %211, %213 : vector<2x32xf32>
    %217 = arith.addf %215, %216 : vector<2x32xf32>
    %218 = math.tanh %217 : vector<2x32xf32>
    %219 = arith.mulf %214, %218 : vector<2x32xf32>
    %c0_69 = arith.constant 0 : index
    %c0_70 = arith.constant 0 : index
    %220 = vector.load %arg7[%c0_69, %c0_70] : memref<2x64xf32, #tpu.memory_space<vmem>>, vector<2x32xf32>
    tpu.vector_store %arg7[%c0_69, %c0_70], %219 {strides = array<i32>} : memref<2x64xf32, #tpu.memory_space<vmem>>, vector<2x32xf32>,
    %c0_71 = arith.constant 0 : index
    %c32_72 = arith.constant 32 : index
    %221 = vector.load %arg7[%c0_71, %c32_72] : memref<2x64xf32, #tpu.memory_space<vmem>>, vector<2x32xf32>
    tpu.vector_store %arg7[%c0_71, %c32_72], %200 {strides = array<i32>} : memref<2x64xf32, #tpu.memory_space<vmem>>, vector<2x32xf32>,
    %c0_73 = arith.constant 0 : index
    %c0_74 = arith.constant 0 : index
    %222 = vector.load %arg7[%c0_73, %c0_74] : memref<2x64xf32, #tpu.memory_space<vmem>>, vector<2x64xf32>
    %cst_75 = arith.constant dense<0.000000e+00> : vector<2x128xf32>
    %223 = tpu.matmul %222, %1, %cst_75 {dimension_numbers = #tpu.dot_dimension_numbers<[1], [0], [0], [1], [0, 0, 1, 1], [], []>} : vector<2x64xf32>, vector<64x128xf32>, vector<2x128xf32> -> vector<2x128xf32>
    %224 = arith.addf %223, %4 : vector<2x128xf32>
    %225 = arith.negf %224 : vector<2x128xf32>
    %226 = math.exp %225 : vector<2x128xf32>
    %cst_76 = arith.constant 1.000000e+00 : f32
    %227 = vector.broadcast %cst_76 : f32 to vector<2x128xf32>
    %228 = arith.addf %227, %226 : vector<2x128xf32>
    %229 = arith.divf %227, %228 : vector<2x128xf32>
    %230 = math.tanh %224 : vector<2x128xf32>
    %231 = vector.extract_strided_slice %229 {offsets = [0, 0], sizes = [2, 32], strides = [1, 1]} : vector<2x128xf32> to vector<2x32xf32>
    %232 = vector.extract_strided_slice %229 {offsets = [0, 32], sizes = [2, 32], strides = [1, 1]} : vector<2x128xf32> to vector<2x32xf32>
    %233 = vector.extract_strided_slice %230 {offsets = [0, 64], sizes = [2, 32], strides = [1, 1]} : vector<2x128xf32> to vector<2x32xf32>
    %234 = vector.extract_strided_slice %229 {offsets = [0, 96], sizes = [2, 32], strides = [1, 1]} : vector<2x128xf32> to vector<2x32xf32>
    %235 = arith.mulf %232, %198 : vector<2x32xf32>
    %236 = arith.mulf %231, %233 : vector<2x32xf32>
    %237 = arith.addf %235, %236 : vector<2x32xf32>
    %238 = math.tanh %237 : vector<2x32xf32>
    %239 = arith.mulf %234, %238 : vector<2x32xf32>
    %c6 = arith.constant 6 : index
    %c0_77 = arith.constant 0 : index
    %c0_78 = arith.constant 0 : index
    %240 = vector.load %arg0[%c6, %c0_77, %c0_78] : memref<8x2x128xf32, #tpu.memory_space<vmem>>, vector<1x2x128xf32>
    %241 = vector.shape_cast %240 : vector<1x2x128xf32> to vector<2x128xf32>
    %cst_79 = arith.constant dense<0.000000e+00> : vector<2x128xf32>
    %242 = tpu.matmul %219, %0, %cst_79 {dimension_numbers = #tpu.dot_dimension_numbers<[1], [0], [0], [1], [0, 0, 1, 1], [], []>} : vector<2x32xf32>, vector<32x128xf32>, vector<2x128xf32> -> vector<2x128xf32>
    %243 = arith.addf %241, %242 : vector<2x128xf32>
    %244 = arith.negf %243 : vector<2x128xf32>
    %245 = math.exp %244 : vector<2x128xf32>
    %cst_80 = arith.constant 1.000000e+00 : f32
    %246 = vector.broadcast %cst_80 : f32 to vector<2x128xf32>
    %247 = arith.addf %246, %245 : vector<2x128xf32>
    %248 = arith.divf %246, %247 : vector<2x128xf32>
    %249 = math.tanh %243 : vector<2x128xf32>
    %250 = vector.extract_strided_slice %248 {offsets = [0, 0], sizes = [2, 32], strides = [1, 1]} : vector<2x128xf32> to vector<2x32xf32>
    %251 = vector.extract_strided_slice %248 {offsets = [0, 32], sizes = [2, 32], strides = [1, 1]} : vector<2x128xf32> to vector<2x32xf32>
    %252 = vector.extract_strided_slice %249 {offsets = [0, 64], sizes = [2, 32], strides = [1, 1]} : vector<2x128xf32> to vector<2x32xf32>
    %253 = vector.extract_strided_slice %248 {offsets = [0, 96], sizes = [2, 32], strides = [1, 1]} : vector<2x128xf32> to vector<2x32xf32>
    %254 = arith.mulf %251, %217 : vector<2x32xf32>
    %255 = arith.mulf %250, %252 : vector<2x32xf32>
    %256 = arith.addf %254, %255 : vector<2x32xf32>
    %257 = math.tanh %256 : vector<2x32xf32>
    %258 = arith.mulf %253, %257 : vector<2x32xf32>
    %c0_81 = arith.constant 0 : index
    %c0_82 = arith.constant 0 : index
    %259 = vector.load %arg7[%c0_81, %c0_82] : memref<2x64xf32, #tpu.memory_space<vmem>>, vector<2x32xf32>
    tpu.vector_store %arg7[%c0_81, %c0_82], %258 {strides = array<i32>} : memref<2x64xf32, #tpu.memory_space<vmem>>, vector<2x32xf32>,
    %c0_83 = arith.constant 0 : index
    %c32_84 = arith.constant 32 : index
    %260 = vector.load %arg7[%c0_83, %c32_84] : memref<2x64xf32, #tpu.memory_space<vmem>>, vector<2x32xf32>
    tpu.vector_store %arg7[%c0_83, %c32_84], %239 {strides = array<i32>} : memref<2x64xf32, #tpu.memory_space<vmem>>, vector<2x32xf32>,
    %c0_85 = arith.constant 0 : index
    %c0_86 = arith.constant 0 : index
    %261 = vector.load %arg7[%c0_85, %c0_86] : memref<2x64xf32, #tpu.memory_space<vmem>>, vector<2x64xf32>
    %cst_87 = arith.constant dense<0.000000e+00> : vector<2x128xf32>
    %262 = tpu.matmul %261, %1, %cst_87 {dimension_numbers = #tpu.dot_dimension_numbers<[1], [0], [0], [1], [0, 0, 1, 1], [], []>} : vector<2x64xf32>, vector<64x128xf32>, vector<2x128xf32> -> vector<2x128xf32>
    %263 = arith.addf %262, %4 : vector<2x128xf32>
    %264 = arith.negf %263 : vector<2x128xf32>
    %265 = math.exp %264 : vector<2x128xf32>
    %cst_88 = arith.constant 1.000000e+00 : f32
    %266 = vector.broadcast %cst_88 : f32 to vector<2x128xf32>
    %267 = arith.addf %266, %265 : vector<2x128xf32>
    %268 = arith.divf %266, %267 : vector<2x128xf32>
    %269 = math.tanh %263 : vector<2x128xf32>
    %270 = vector.extract_strided_slice %268 {offsets = [0, 0], sizes = [2, 32], strides = [1, 1]} : vector<2x128xf32> to vector<2x32xf32>
    %271 = vector.extract_strided_slice %268 {offsets = [0, 32], sizes = [2, 32], strides = [1, 1]} : vector<2x128xf32> to vector<2x32xf32>
    %272 = vector.extract_strided_slice %269 {offsets = [0, 64], sizes = [2, 32], strides = [1, 1]} : vector<2x128xf32> to vector<2x32xf32>
    %273 = vector.extract_strided_slice %268 {offsets = [0, 96], sizes = [2, 32], strides = [1, 1]} : vector<2x128xf32> to vector<2x32xf32>
    %274 = arith.mulf %271, %237 : vector<2x32xf32>
    %275 = arith.mulf %270, %272 : vector<2x32xf32>
    %276 = arith.addf %274, %275 : vector<2x32xf32>
    %277 = math.tanh %276 : vector<2x32xf32>
    %278 = arith.mulf %273, %277 : vector<2x32xf32>
    %c7 = arith.constant 7 : index
    %c0_89 = arith.constant 0 : index
    %c0_90 = arith.constant 0 : index
    %279 = vector.load %arg0[%c7, %c0_89, %c0_90] : memref<8x2x128xf32, #tpu.memory_space<vmem>>, vector<1x2x128xf32>
    %280 = vector.shape_cast %279 : vector<1x2x128xf32> to vector<2x128xf32>
    %cst_91 = arith.constant dense<0.000000e+00> : vector<2x128xf32>
    %281 = tpu.matmul %258, %0, %cst_91 {dimension_numbers = #tpu.dot_dimension_numbers<[1], [0], [0], [1], [0, 0, 1, 1], [], []>} : vector<2x32xf32>, vector<32x128xf32>, vector<2x128xf32> -> vector<2x128xf32>
    %282 = arith.addf %280, %281 : vector<2x128xf32>
    %283 = arith.negf %282 : vector<2x128xf32>
    %284 = math.exp %283 : vector<2x128xf32>
    %cst_92 = arith.constant 1.000000e+00 : f32
    %285 = vector.broadcast %cst_92 : f32 to vector<2x128xf32>
    %286 = arith.addf %285, %284 : vector<2x128xf32>
    %287 = arith.divf %285, %286 : vector<2x128xf32>
    %288 = math.tanh %282 : vector<2x128xf32>
    %289 = vector.extract_strided_slice %287 {offsets = [0, 0], sizes = [2, 32], strides = [1, 1]} : vector<2x128xf32> to vector<2x32xf32>
    %290 = vector.extract_strided_slice %287 {offsets = [0, 32], sizes = [2, 32], strides = [1, 1]} : vector<2x128xf32> to vector<2x32xf32>
    %291 = vector.extract_strided_slice %288 {offsets = [0, 64], sizes = [2, 32], strides = [1, 1]} : vector<2x128xf32> to vector<2x32xf32>
    %292 = vector.extract_strided_slice %287 {offsets = [0, 96], sizes = [2, 32], strides = [1, 1]} : vector<2x128xf32> to vector<2x32xf32>
    %293 = arith.mulf %290, %256 : vector<2x32xf32>
    %294 = arith.mulf %289, %291 : vector<2x32xf32>
    %295 = arith.addf %293, %294 : vector<2x32xf32>
    %296 = math.tanh %295 : vector<2x32xf32>
    %297 = arith.mulf %292, %296 : vector<2x32xf32>
    %c0_93 = arith.constant 0 : index
    %c0_94 = arith.constant 0 : index
    %298 = vector.load %arg7[%c0_93, %c0_94] : memref<2x64xf32, #tpu.memory_space<vmem>>, vector<2x32xf32>
    tpu.vector_store %arg7[%c0_93, %c0_94], %297 {strides = array<i32>} : memref<2x64xf32, #tpu.memory_space<vmem>>, vector<2x32xf32>,
    %c0_95 = arith.constant 0 : index
    %c32_96 = arith.constant 32 : index
    %299 = vector.load %arg7[%c0_95, %c32_96] : memref<2x64xf32, #tpu.memory_space<vmem>>, vector<2x32xf32>
    tpu.vector_store %arg7[%c0_95, %c32_96], %278 {strides = array<i32>} : memref<2x64xf32, #tpu.memory_space<vmem>>, vector<2x32xf32>,
    %c0_97 = arith.constant 0 : index
    %c0_98 = arith.constant 0 : index
    %300 = vector.load %arg7[%c0_97, %c0_98] : memref<2x64xf32, #tpu.memory_space<vmem>>, vector<2x64xf32>
    %cst_99 = arith.constant dense<0.000000e+00> : vector<2x128xf32>
    %301 = tpu.matmul %300, %1, %cst_99 {dimension_numbers = #tpu.dot_dimension_numbers<[1], [0], [0], [1], [0, 0, 1, 1], [], []>} : vector<2x64xf32>, vector<64x128xf32>, vector<2x128xf32> -> vector<2x128xf32>
    %302 = arith.addf %301, %4 : vector<2x128xf32>
    %303 = arith.negf %302 : vector<2x128xf32>
    %304 = math.exp %303 : vector<2x128xf32>
    %cst_100 = arith.constant 1.000000e+00 : f32
    %305 = vector.broadcast %cst_100 : f32 to vector<2x128xf32>
    %306 = arith.addf %305, %304 : vector<2x128xf32>
    %307 = arith.divf %305, %306 : vector<2x128xf32>
    %308 = math.tanh %302 : vector<2x128xf32>
    %309 = vector.extract_strided_slice %307 {offsets = [0, 0], sizes = [2, 32], strides = [1, 1]} : vector<2x128xf32> to vector<2x32xf32>
    %310 = vector.extract_strided_slice %307 {offsets = [0, 32], sizes = [2, 32], strides = [1, 1]} : vector<2x128xf32> to vector<2x32xf32>
    %311 = vector.extract_strided_slice %308 {offsets = [0, 64], sizes = [2, 32], strides = [1, 1]} : vector<2x128xf32> to vector<2x32xf32>
    %312 = vector.extract_strided_slice %307 {offsets = [0, 96], sizes = [2, 32], strides = [1, 1]} : vector<2x128xf32> to vector<2x32xf32>
    %313 = arith.mulf %310, %276 : vector<2x32xf32>
    %314 = arith.mulf %309, %311 : vector<2x32xf32>
    %315 = arith.addf %313, %314 : vector<2x32xf32>
    %316 = math.tanh %315 : vector<2x32xf32>
    %317 = arith.mulf %312, %316 : vector<2x32xf32>
    %c0_101 = arith.constant 0 : index
    %c0_102 = arith.constant 0 : index
    %318 = vector.load %arg4[%c0_101, %c0_102] : memref<1x32xf32, #tpu.memory_space<vmem>>, vector<1x32xf32>
    %319 = vector.broadcast %318 : vector<1x32xf32> to vector<2x32xf32>
    %320 = arith.mulf %317, %319 : vector<2x32xf32>
    %cst_103 = arith.constant dense<0.000000e+00> : vector<2xf32>
    %321 = vector.multi_reduction <add>, %320, %cst_103 [1] : vector<2x32xf32> to vector<2xf32>
    %322 = vector.shape_cast %321 : vector<2xf32> to vector<2x1xf32>
    %c0_104 = arith.constant 0 : index
    %c0_105 = arith.constant 0 : index
    %323 = vector.load %arg5[%c0_104, %c0_105] : memref<1x1xf32, #tpu.memory_space<vmem>>, vector<1x1xf32>
    %324 = vector.broadcast %323 : vector<1x1xf32> to vector<2x1xf32>
    %325 = arith.addf %322, %324 : vector<2x1xf32>
    %c0_106 = arith.constant 0 : index
    %c0_107 = arith.constant 0 : index
    %326 = vector.load %arg6[%c0_106, %c0_107] : memref<2x1xf32, #tpu.memory_space<vmem>>, vector<2x1xf32>
    tpu.vector_store %arg6[%c0_106, %c0_107], %325 {strides = array<i32>} : memref<2x1xf32, #tpu.memory_space<vmem>>, vector<2x1xf32>,
    return
  }
}

</mosaic_0001>

<llo_original>
// kernel: lstm_forward.1
$region0: #{lstm_forward.1}
  #allocation0 [shape = 'u32[]', space=smem, size = 0x4, offset = 0x4, fixed_abs, tag = 'smem constant byte address 0x4 - core index']
  #allocation1 [shape = 'u32[144,128]{1,0:T(1,128)}', space=vmem, size = 0x12000, scoped, tag = 'internal scratch']
  #allocation2 [shape = 'f32[2,64]{1,0:T(2,128)}', space=vmem, size = 0x400, scoped, tag = 'scratch operand']
  #allocation3 [shape = 'f32[1,1]{1,0:T(1,128)S(1)}', space=vmem, size = 0x200, scoped, tag = 'scoped memory for lstm_forward.1']
  %s0 = inlined_call_operand.vmem [shape: f32[8,2,128], index: 0, kind: input, shape index: {}]
  %s1 = inlined_call_operand.hbm [shape: f32[32,128], index: 1, kind: input, shape index: {}]
  %s2 = inlined_call_operand.vmem [shape: f32[64,128], index: 2, kind: input, shape index: {}]
  %s3 = inlined_call_operand.vmem [shape: f32[1,128], index: 3, kind: input, shape index: {}]
  %s4 = inlined_call_operand.vmem [shape: f32[1,32], index: 4, kind: input, shape index: {}]
  %s5 = inlined_call_operand.<no memory space> [shape: f32[1,1], index: 5, kind: input, shape index: {}]
  %s6 = inlined_call_operand.vmem [shape: f32[2,1], index: 6, kind: output, shape index: {}]
  %s7 = sld [smem:[#allocation0]]
  $region38: #{lstm_forward.1} parent=0
    _
  %s9 = ssub.s32 1, %s7
  %s10 = scalar_select 0, %s9, %s7
  %v11 = vstv %s5
  %12 = vst [vmem:[#allocation3] sm:$0x1] %v11
  $region1: #{lstm_forward.1} parent=0
    #allocation4 [shape = 'u8[16384]{0}', space=vmem, size = 0x4000, scoped, tag = 'input window, operand 1, single buffered']
    #allocation5 [shape = 's32[1]{0}', space=sflag, size = 0x4, scoped, tag = 'scoped memory for lstm_forward.1']
    %13 = vsyncpa [#allocation5], 0
    // Predicated region
    $region2: #{lstm_forward.1} parent=1 // pred_check
      _
    $region3: #{lstm_forward.1} parent=1 // pred_check_branch
      %15 = sbr.rel (0) target = $region5
    $region4: #{lstm_forward.1} parent=1 // pred_region
      _
    $region5: #{lstm_forward.1} parent=1 // pred_fallthru
      _
    // Predicated region
    $region6: #{lstm_forward.1} parent=1 // pred_check
      _
    $region7: #{lstm_forward.1} parent=1 // pred_check_branch
      %17 = sbr.rel (0) target = $region9
    $region8: #{lstm_forward.1} parent=1 // pred_region
      %s19 = ssub.s32 512, 512
      %20 = vsyncadd [#allocation5], %s19
      %s21 = sshll.u32 [#allocation4], 4
      %s22 = int_to_ptr.vmem [resolvable:$true] %s21
      %27 = dma.hbm_to_vmem [thread:$0]  %s1, 512, %s22, [#allocation5], 128, 128, 8
    $region9: #{lstm_forward.1} parent=1 // pred_fallthru
      _
    // Predicated region
    $region10: #{lstm_forward.1} parent=1 // pred_check
      _
    $region11: #{lstm_forward.1} parent=1 // pred_check_branch
      %29 = sbr.rel (0) target = $region13
    $region12: #{lstm_forward.1} parent=1 // pred_region
      _
    $region13: #{lstm_forward.1} parent=1 // pred_fallthru
      _
    // Predicated region
    $region14: #{lstm_forward.1} parent=1 // pred_check
      _
    $region15: #{lstm_forward.1} parent=1 // pred_check_branch
      %31 = sbr.rel (0) target = $region17
    $region16: #{lstm_forward.1} parent=1 // pred_region
      _
    $region17: #{lstm_forward.1} parent=1 // pred_fallthru
      _
    // Predicated region
    $region18: #{lstm_forward.1} parent=1 // pred_check
      _
    $region19: #{lstm_forward.1} parent=1 // pred_check_branch
      %33 = sbr.rel (0) target = $region21
    $region20: #{lstm_forward.1} parent=1 // pred_region
      _
    $region21: #{lstm_forward.1} parent=1 // pred_fallthru
      _
    // Predicated region
    $region22: #{lstm_forward.1} parent=1 // pred_check
      _
    $region23: #{lstm_forward.1} parent=1 // pred_check_branch
      %35 = sbr.rel (0) target = $region25
    $region24: #{lstm_forward.1} parent=1 // pred_region
      _
    $region25: #{lstm_forward.1} parent=1 // pred_fallthru
      _
    // Predicated region
    $region26: #{lstm_forward.1} parent=1 // pred_check
      _
    $region27: #{lstm_forward.1} parent=1 // pred_check_branch
      %37 = sbr.rel (0) target = $region29
    $region28: #{lstm_forward.1} parent=1 // pred_region
      %38 = dma.done [#allocation5], 512
    $region29: #{lstm_forward.1} parent=1 // pred_fallthru
      _
    %v39 = vld [vmem:[#allocation4] sm:$0xff]
    %v40 = vld [vmem:[#allocation4 + $0x8] sm:$0xff]
    %v41 = vld [vmem:[#allocation4 + $0x10] sm:$0xff]
    %v42 = vld [vmem:[#allocation4 + $0x18] sm:$0xff]
    %v43 = vld [vmem:[%s2] sm:$0xff]
    %v44 = vld [vmem:[%s2 + $0x8] sm:$0xff]
    %v45 = vld [vmem:[%s2 + $0x10] sm:$0xff]
    %v46 = vld [vmem:[%s2 + $0x18] sm:$0xff]
    %v47 = vld [vmem:[%s2 + $0x20] sm:$0xff]
    %v48 = vld [vmem:[%s2 + $0x28] sm:$0xff]
    %v49 = vld [vmem:[%s2 + $0x30] sm:$0xff]
    %v50 = vld [vmem:[%s2 + $0x38] sm:$0xff]
    %v51 = vld [vmem:[%s3] sm:$0x1]
    %v53 = vlaneseq
    %v54 = vshrl.u32 %v53, 7
    %v55 = vsub.s32 0, %v54
    %v56 = vrot.slane %v51, %v55
    %v58 = vld [vmem:[%s0] sm:$0x3]
    %vm59 = vcmask 261120
    %v61 = vsel %vm59, 0.0, 0
    %63 = vmatprep.subr.mxu0 0.0
    %64 = vmatpush1.msra.mxu0 %v39
    %65 = vmatprep.subr.mxu0 0.0
    %66 = vmatpush1.msra.mxu0 %v40
    %67 = vmatprep.subr.mxu0 0.0
    %68 = vmatpush1.msra.mxu0 %v41
    %69 = vmatprep.subr.mxu0 0.0
    %70 = vmatpush1.msra.mxu0 %v42
    %71 = vmatprep.subr.mxu0 0.0
    %72 = vmatpush1.msra.mxu0 0.0
    %73 = vmatprep.subr.mxu0 0.0
    %74 = vmatpush1.msra.mxu0 0.0
    %75 = vmatprep.subr.mxu0 0.0
    %76 = vmatpush1.msra.mxu0 0.0
    %77 = vmatprep.subr.mxu0 0.0
    %78 = vmatpush1.msra.mxu0 0.0
    %79 = vmatprep.subr.mxu0 0.0
    %80 = vmatpush1.msra.mxu0 0.0
    %81 = vmatprep.subr.mxu0 0.0
    %82 = vmatpush1.msra.mxu0 0.0
    %83 = vmatprep.subr.mxu0 0.0
    %84 = vmatpush1.msra.mxu0 0.0
    %85 = vmatprep.subr.mxu0 0.0
    %86 = vmatpush1.msra.mxu0 0.0
    %87 = vmatprep.subr.mxu0 0.0
    %88 = vmatpush1.msra.mxu0 0.0
    %89 = vmatprep.subr.mxu0 0.0
    %90 = vmatpush1.msra.mxu0 0.0
    %91 = vmatprep.subr.mxu0 0.0
    %92 = vmatpush1.msra.mxu0 0.0
    %93 = vmatprep.subr.mxu0 0.0
    %94 = vmatpush1.msra.mxu0 0.0
    %95 = vmatprep.subr.mxu0 0.0
    %96 = vmatpush1.msra.mxu0 0.0
    %97 = vmatprep.subr.mxu0 0.0
    %98 = vmatpush1.msra.mxu0 0.0
    %99 = vmatprep.subr.mxu0 0.0
    %100 = vmatpush1.msra.mxu0 0.0
    %101 = vmatprep.subr.mxu0 0.0
    %102 = vmatpush1.msra.mxu0 0.0
    %103 = vmatprep.subr.mxu0 0.0
    %104 = vmatpush1.msra.mxu0 0.0
    %105 = vmatprep.subr.mxu0 0.0
    %106 = vmatpush1.msra.mxu0 0.0
    %107 = vmatprep.subr.mxu0 0.0
    %108 = vmatpush1.msra.mxu0 0.0
    %109 = vmatprep.subr.mxu0 0.0
    %110 = vmatpush1.msra.mxu0 0.0
    %111 = vmatprep.subr.mxu0 0.0
    %112 = vmatpush1.msra.mxu0 0.0
    %113 = vmatprep.subr.mxu0 0.0
    %114 = vmatpush1.msra.mxu0 0.0
    %115 = vmatprep.subr.mxu0 0.0
    %116 = vmatpush1.msra.mxu0 0.0
    %117 = vmatprep.subr.mxu0 0.0
    %118 = vmatpush1.msra.mxu0 0.0
    %119 = vmatprep.subr.mxu0 0.0
    %120 = vmatpush1.msra.mxu0 0.0
    %121 = vmatprep.subr.mxu0 0.0
    %122 = vmatpush1.msra.mxu0 0.0
    %123 = vmatprep.subr.mxu0 0.0
    %124 = vmatpush1.msra.mxu0 0.0
    %125 = vmatprep.subr.mxu0 0.0
    %126 = vmatpush1.msra.mxu0 0.0
    %127 = vmatprep.mubr.f32.mxu0 0.0
    %128 = vmatmul.mubr.f32.gmra.mrb[0].mxu0 %v61
    %v129 = vpop.f32.mrb[0].mxu0
    %v130 = vadd.f32 0.0, %v129
    %v131 = vpop.f32.mrb[0].mxu0
    %132 = vdwg.mxu0
    %v133 = vadd.f32 %v58, %v130
    %v134 = vxor.u32 %v133, 2147483648
    %v135 = vmul.f32 %v134, 1.442695
    %v136 = vpow.pop %v135
    %v137 = vadd.f32 %v136, 1.0
    %v138 = vrcp.pop %v137
    %v139 = vmul.f32 1.0, %v138
    %v140 = vtanh.pop %v133
    %v141 = vmul.f32 %v139, 0.0
    %143 = vrot.lane.b32.xlu0 %v140, 64
    %v144 = vpop.permute.xlu0 %143
    %v146 = vmul.f32 %v139, %v144
    %148 = vrot.lane.b32.xlu0 %v146, 32
    %v149 = vpop.permute.xlu0 %148
    %v151 = vadd.f32 %v141, %v149
    %v152 = vtanh.pop %v151
    %154 = vrot.lane.b32.xlu0 %v152, 64
    %v155 = vpop.permute.xlu0 %154
    %v157 = vmul.f32 %v139, %v155
    %159 = vrot.lane.b32.xlu0 %v157, 32
    %v160 = vpop.permute.xlu0 %159
    %vm162 = vcmask 254976
    %163 = vst.msk [vmem:[#allocation2] sm:$0x3] %vm162, %v160
    %vm164 = vcmask 517376
    %165 = vst.msk [vmem:[#allocation2] sm:$0x3] %vm164, 0.0
    %v166 = vld [vmem:[#allocation2] sm:$0x3]
    %vm167 = vcmask 523264
    %v169 = vsel %vm167, %v166, 0
    %171 = vmatprep.subr.mxu0 0.0
    %172 = vmatpush1.msra.mxu0 %v43
    %173 = vmatprep.subr.mxu0 0.0
    %174 = vmatpush1.msra.mxu0 %v44
    %175 = vmatprep.subr.mxu0 0.0
    %176 = vmatpush1.msra.mxu0 %v45
    %177 = vmatprep.subr.mxu0 0.0
    %178 = vmatpush1.msra.mxu0 %v46
    %179 = vmatprep.subr.mxu0 0.0
    %180 = vmatpush1.msra.mxu0 %v47
    %181 = vmatprep.subr.mxu0 0.0
    %182 = vmatpush1.msra.mxu0 %v48
    %183 = vmatprep.subr.mxu0 0.0
    %184 = vmatpush1.msra.mxu0 %v49
    %185 = vmatprep.subr.mxu0 0.0
    %186 = vmatpush1.msra.mxu0 %v50
    %187 = vmatprep.subr.mxu0 0.0
    %188 = vmatpush1.msra.mxu0 0.0
    %189 = vmatprep.subr.mxu0 0.0
    %190 = vmatpush1.msra.mxu0 0.0
    %191 = vmatprep.subr.mxu0 0.0
    %192 = vmatpush1.msra.mxu0 0.0
    %193 = vmatprep.subr.mxu0 0.0
    %194 = vmatpush1.msra.mxu0 0.0
    %195 = vmatprep.subr.mxu0 0.0
    %196 = vmatpush1.msra.mxu0 0.0
    %197 = vmatprep.subr.mxu0 0.0
    %198 = vmatpush1.msra.mxu0 0.0
    %199 = vmatprep.subr.mxu0 0.0
    %200 = vmatpush1.msra.mxu0 0.0
    %201 = vmatprep.subr.mxu0 0.0
    %202 = vmatpush1.msra.mxu0 0.0
    %203 = vmatprep.subr.mxu0 0.0
    %204 = vmatpush1.msra.mxu0 0.0
    %205 = vmatprep.subr.mxu0 0.0
    %206 = vmatpush1.msra.mxu0 0.0
    %207 = vmatprep.subr.mxu0 0.0
    %208 = vmatpush1.msra.mxu0 0.0
    %209 = vmatprep.subr.mxu0 0.0
    %210 = vmatpush1.msra.mxu0 0.0
    %211 = vmatprep.subr.mxu0 0.0
    %212 = vmatpush1.msra.mxu0 0.0
    %213 = vmatprep.subr.mxu0 0.0
    %214 = vmatpush1.msra.mxu0 0.0
    %215 = vmatprep.subr.mxu0 0.0
    %216 = vmatpush1.msra.mxu0 0.0
    %217 = vmatprep.subr.mxu0 0.0
    %218 = vmatpush1.msra.mxu0 0.0
    %219 = vmatprep.subr.mxu0 0.0
    %220 = vmatpush1.msra.mxu0 0.0
    %221 = vmatprep.subr.mxu0 0.0
    %222 = vmatpush1.msra.mxu0 0.0
    %223 = vmatprep.subr.mxu0 0.0
    %224 = vmatpush1.msra.mxu0 0.0
    %225 = vmatprep.subr.mxu0 0.0
    %226 = vmatpush1.msra.mxu0 0.0
    %227 = vmatprep.subr.mxu0 0.0
    %228 = vmatpush1.msra.mxu0 0.0
    %229 = vmatprep.subr.mxu0 0.0
    %230 = vmatpush1.msra.mxu0 0.0
    %231 = vmatprep.subr.mxu0 0.0
    %232 = vmatpush1.msra.mxu0 0.0
    %233 = vmatprep.subr.mxu0 0.0
    %234 = vmatpush1.msra.mxu0 0.0
    %235 = vmatprep.mubr.f32.mxu0 0.0
    %236 = vmatmul.mubr.f32.gmra.mrb[0].mxu0 %v169
    %v237 = vpop.f32.mrb[0].mxu0
    %v238 = vadd.f32 %v56, %v237
    %v239 = vpop.f32.mrb[0].mxu0
    %240 = vdwg.mxu0
    %v241 = vxor.u32 %v238, 2147483648
    %v242 = vmul.f32 %v241, 1.442695
    %v243 = vpow.pop %v242
    %v244 = vadd.f32 %v243, 1.0
    %v245 = vrcp.pop %v244
    %v246 = vmul.f32 1.0, %v245
    %v247 = vtanh.pop %v238
    %v248 = vmul.f32 %v246, 0.0
    %250 = vrot.lane.b32.xlu0 %v247, 64
    %v251 = vpop.permute.xlu0 %250
    %v253 = vmul.f32 %v246, %v251
    %255 = vrot.lane.b32.xlu0 %v253, 32
    %v256 = vpop.permute.xlu0 %255
    %v258 = vadd.f32 %v248, %v256
    %v259 = vtanh.pop %v258
    %261 = vrot.lane.b32.xlu0 %v259, 64
    %v262 = vpop.permute.xlu0 %261
    %v264 = vmul.f32 %v246, %v262
    %s265 = scalar_lea.vmem %s0, 2
    %v266 = vld [vmem:[%s265] sm:$0x3]
    %v267 = vsel %vm59, %v160, 0
    %269 = vmatprep.subr.mxu0 0.0
    %270 = vmatpush1.msra.mxu0 %v39
    %271 = vmatprep.subr.mxu0 0.0
    %272 = vmatpush1.msra.mxu0 %v40
    %273 = vmatprep.subr.mxu0 0.0
    %274 = vmatpush1.msra.mxu0 %v41
    %275 = vmatprep.subr.mxu0 0.0
    %276 = vmatpush1.msra.mxu0 %v42
    %277 = vmatprep.subr.mxu0 0.0
    %278 = vmatpush1.msra.mxu0 0.0
    %279 = vmatprep.subr.mxu0 0.0
    %280 = vmatpush1.msra.mxu0 0.0
    %281 = vmatprep.subr.mxu0 0.0
    %282 = vmatpush1.msra.mxu0 0.0
    %283 = vmatprep.subr.mxu0 0.0
    %284 = vmatpush1.msra.mxu0 0.0
    %285 = vmatprep.subr.mxu0 0.0
    %286 = vmatpush1.msra.mxu0 0.0
    %287 = vmatprep.subr.mxu0 0.0
    %288 = vmatpush1.msra.mxu0 0.0
    %289 = vmatprep.subr.mxu0 0.0
    %290 = vmatpush1.msra.mxu0 0.0
    %291 = vmatprep.subr.mxu0 0.0
    %292 = vmatpush1.msra.mxu0 0.0
    %293 = vmatprep.subr.mxu0 0.0
    %294 = vmatpush1.msra.mxu0 0.0
    %295 = vmatprep.subr.mxu0 0.0
    %296 = vmatpush1.msra.mxu0 0.0
    %297 = vmatprep.subr.mxu0 0.0
    %298 = vmatpush1.msra.mxu0 0.0
    %299 = vmatprep.subr.mxu0 0.0
    %300 = vmatpush1.msra.mxu0 0.0
    %301 = vmatprep.subr.mxu0 0.0
    %302 = vmatpush1.msra.mxu0 0.0
    %303 = vmatprep.subr.mxu0 0.0
    %304 = vmatpush1.msra.mxu0 0.0
    %305 = vmatprep.subr.mxu0 0.0
    %306 = vmatpush1.msra.mxu0 0.0
    %307 = vmatprep.subr.mxu0 0.0
    %308 = vmatpush1.msra.mxu0 0.0
    %309 = vmatprep.subr.mxu0 0.0
    %310 = vmatpush1.msra.mxu0 0.0
    %311 = vmatprep.subr.mxu0 0.0
    %312 = vmatpush1.msra.mxu0 0.0
    %313 = vmatprep.subr.mxu0 0.0
    %314 = vmatpush1.msra.mxu0 0.0
    %315 = vmatprep.subr.mxu0 0.0
    %316 = vmatpush1.msra.mxu0 0.0
    %317 = vmatprep.subr.mxu0 0.0
    %318 = vmatpush1.msra.mxu0 0.0
    %319 = vmatprep.subr.mxu0 0.0
    %320 = vmatpush1.msra.mxu0 0.0
    %321 = vmatprep.subr.mxu0 0.0
    %322 = vmatpush1.msra.mxu0 0.0
    %323 = vmatprep.subr.mxu0 0.0
    %324 = vmatpush1.msra.mxu0 0.0
    %325 = vmatprep.subr.mxu0 0.0
    %326 = vmatpush1.msra.mxu0 0.0
    %327 = vmatprep.subr.mxu0 0.0
    %328 = vmatpush1.msra.mxu0 0.0
    %329 = vmatprep.subr.mxu0 0.0
    %330 = vmatpush1.msra.mxu0 0.0
    %331 = vmatprep.subr.mxu0 0.0
    %332 = vmatpush1.msra.mxu0 0.0
    %333 = vmatprep.mubr.f32.mxu0 0.0
    %334 = vmatmul.mubr.f32.gmra.mrb[0].mxu0 %v267
    %v335 = vpop.f32.mrb[0].mxu0
    %v336 = vadd.f32 0.0, %v335
    %v337 = vpop.f32.mrb[0].mxu0
    %338 = vdwg.mxu0
    %v339 = vadd.f32 %v266, %v336
    %v340 = vxor.u32 %v339, 2147483648
    %v341 = vmul.f32 %v340, 1.442695
    %v342 = vpow.pop %v341
    %v343 = vadd.f32 %v342, 1.0
    %v344 = vrcp.pop %v343
    %v345 = vmul.f32 1.0, %v344
    %v346 = vtanh.pop %v339
    %v347 = vmul.f32 %v345, %v151
    %349 = vrot.lane.b32.xlu0 %v346, 64
    %v350 = vpop.permute.xlu0 %349
    %v352 = vmul.f32 %v345, %v350
    %354 = vrot.lane.b32.xlu0 %v352, 32
    %v355 = vpop.permute.xlu0 %354
    %v357 = vadd.f32 %v347, %v355
    %v358 = vtanh.pop %v357
    %360 = vrot.lane.b32.xlu0 %v358, 64
    %v361 = vpop.permute.xlu0 %360
    %v363 = vmul.f32 %v345, %v361
    %365 = vrot.lane.b32.xlu0 %v363, 32
    %v366 = vpop.permute.xlu0 %365
    %368 = vst.msk [vmem:[#allocation2] sm:$0x3] %vm162, %v366
    %370 = vrot.lane.b32.xlu0 %v264, 64
    %v371 = vpop.permute.xlu0 %370
    %373 = vst.msk [vmem:[#allocation2] sm:$0x3] %vm164, %v371
    %v374 = vld [vmem:[#allocation2] sm:$0x3]
    %v376 = vsel %vm167, %v374, 0
    %378 = vmatprep.subr.mxu0 0.0
    %379 = vmatpush1.msra.mxu0 %v43
    %380 = vmatprep.subr.mxu0 0.0
    %381 = vmatpush1.msra.mxu0 %v44
    %382 = vmatprep.subr.mxu0 0.0
    %383 = vmatpush1.msra.mxu0 %v45
    %384 = vmatprep.subr.mxu0 0.0
    %385 = vmatpush1.msra.mxu0 %v46
    %386 = vmatprep.subr.mxu0 0.0
    %387 = vmatpush1.msra.mxu0 %v47
    %388 = vmatprep.subr.mxu0 0.0
    %389 = vmatpush1.msra.mxu0 %v48
    %390 = vmatprep.subr.mxu0 0.0
    %391 = vmatpush1.msra.mxu0 %v49
    %392 = vmatprep.subr.mxu0 0.0
    %393 = vmatpush1.msra.mxu0 %v50
    %394 = vmatprep.subr.mxu0 0.0
    %395 = vmatpush1.msra.mxu0 0.0
    %396 = vmatprep.subr.mxu0 0.0
    %397 = vmatpush1.msra.mxu0 0.0
    %398 = vmatprep.subr.mxu0 0.0
    %399 = vmatpush1.msra.mxu0 0.0
    %400 = vmatprep.subr.mxu0 0.0
    %401 = vmatpush1.msra.mxu0 0.0
    %402 = vmatprep.subr.mxu0 0.0
    %403 = vmatpush1.msra.mxu0 0.0
    %404 = vmatprep.subr.mxu0 0.0
    %405 = vmatpush1.msra.mxu0 0.0
    %406 = vmatprep.subr.mxu0 0.0
    %407 = vmatpush1.msra.mxu0 0.0
    %408 = vmatprep.subr.mxu0 0.0
    %409 = vmatpush1.msra.mxu0 0.0
    %410 = vmatprep.subr.mxu0 0.0
    %411 = vmatpush1.msra.mxu0 0.0
    %412 = vmatprep.subr.mxu0 0.0
    %413 = vmatpush1.msra.mxu0 0.0
    %414 = vmatprep.subr.mxu0 0.0
    %415 = vmatpush1.msra.mxu0 0.0
    %416 = vmatprep.subr.mxu0 0.0
    %417 = vmatpush1.msra.mxu0 0.0
    %418 = vmatprep.subr.mxu0 0.0
    %419 = vmatpush1.msra.mxu0 0.0
    %420 = vmatprep.subr.mxu0 0.0
    %421 = vmatpush1.msra.mxu0 0.0
    %422 = vmatprep.subr.mxu0 0.0
    %423 = vmatpush1.msra.mxu0 0.0
    %424 = vmatprep.subr.mxu0 0.0
    %425 = vmatpush1.msra.mxu0 0.0
    %426 = vmatprep.subr.mxu0 0.0
    %427 = vmatpush1.msra.mxu0 0.0
    %428 = vmatprep.subr.mxu0 0.0
    %429 = vmatpush1.msra.mxu0 0.0
    %430 = vmatprep.subr.mxu0 0.0
    %431 = vmatpush1.msra.mxu0 0.0
    %432 = vmatprep.subr.mxu0 0.0
    %433 = vmatpush1.msra.mxu0 0.0
    %434 = vmatprep.subr.mxu0 0.0
    %435 = vmatpush1.msra.mxu0 0.0
    %436 = vmatprep.subr.mxu0 0.0
    %437 = vmatpush1.msra.mxu0 0.0
    %438 = vmatprep.subr.mxu0 0.0
    %439 = vmatpush1.msra.mxu0 0.0
    %440 = vmatprep.subr.mxu0 0.0
    %441 = vmatpush1.msra.mxu0 0.0
    %442 = vmatprep.mubr.f32.mxu0 0.0
    %443 = vmatmul.mubr.f32.gmra.mrb[0].mxu0 %v376
    %v444 = vpop.f32.mrb[0].mxu0
    %v445 = vadd.f32 %v56, %v444
    %v446 = vpop.f32.mrb[0].mxu0
    %447 = vdwg.mxu0
    %v448 = vxor.u32 %v445, 2147483648
    %v449 = vmul.f32 %v448, 1.442695
    %v450 = vpow.pop %v449
    %v451 = vadd.f32 %v450, 1.0
    %v452 = vrcp.pop %v451
    %v453 = vmul.f32 1.0, %v452
    %v454 = vtanh.pop %v445
    %v455 = vmul.f32 %v453, %v258
    %457 = vrot.lane.b32.xlu0 %v454, 64
    %v458 = vpop.permute.xlu0 %457
    %v460 = vmul.f32 %v453, %v458
    %462 = vrot.lane.b32.xlu0 %v460, 32
    %v463 = vpop.permute.xlu0 %462
    %v465 = vadd.f32 %v455, %v463
    %v466 = vtanh.pop %v465
    %468 = vrot.lane.b32.xlu0 %v466, 64
    %v469 = vpop.permute.xlu0 %468
    %v471 = vmul.f32 %v453, %v469
    %s472 = scalar_lea.vmem %s0, 4
    %v473 = vld [vmem:[%s472] sm:$0x3]
    %v474 = vsel %vm59, %v366, 0
    %476 = vmatprep.subr.mxu0 0.0
    %477 = vmatpush1.msra.mxu0 %v39
    %478 = vmatprep.subr.mxu0 0.0
    %479 = vmatpush1.msra.mxu0 %v40
    %480 = vmatprep.subr.mxu0 0.0
    %481 = vmatpush1.msra.mxu0 %v41
    %482 = vmatprep.subr.mxu0 0.0
    %483 = vmatpush1.msra.mxu0 %v42
    %484 = vmatprep.subr.mxu0 0.0
    %485 = vmatpush1.msra.mxu0 0.0
    %486 = vmatprep.subr.mxu0 0.0
    %487 = vmatpush1.msra.mxu0 0.0
    %488 = vmatprep.subr.mxu0 0.0
    %489 = vmatpush1.msra.mxu0 0.0
    %490 = vmatprep.subr.mxu0 0.0
    %491 = vmatpush1.msra.mxu0 0.0
    %492 = vmatprep.subr.mxu0 0.0
    %493 = vmatpush1.msra.mxu0 0.0
    %494 = vmatprep.subr.mxu0 0.0
    %495 = vmatpush1.msra.mxu0 0.0
    %496 = vmatprep.subr.mxu0 0.0
    %497 = vmatpush1.msra.mxu0 0.0
    %498 = vmatprep.subr.mxu0 0.0
    %499 = vmatpush1.msra.mxu0 0.0
    %500 = vmatprep.subr.mxu0 0.0
    %501 = vmatpush1.msra.mxu0 0.0
    %502 = vmatprep.subr.mxu0 0.0
    %503 = vmatpush1.msra.mxu0 0.0
    %504 = vmatprep.subr.mxu0 0.0
    %505 = vmatpush1.msra.mxu0 0.0
    %506 = vmatprep.subr.mxu0 0.0
    %507 = vmatpush1.msra.mxu0 0.0
    %508 = vmatprep.subr.mxu0 0.0
    %509 = vmatpush1.msra.mxu0 0.0
    %510 = vmatprep.subr.mxu0 0.0
    %511 = vmatpush1.msra.mxu0 0.0
    %512 = vmatprep.subr.mxu0 0.0
    %513 = vmatpush1.msra.mxu0 0.0
    %514 = vmatprep.subr.mxu0 0.0
    %515 = vmatpush1.msra.mxu0 0.0
    %516 = vmatprep.subr.mxu0 0.0
    %517 = vmatpush1.msra.mxu0 0.0
    %518 = vmatprep.subr.mxu0 0.0
    %519 = vmatpush1.msra.mxu0 0.0
    %520 = vmatprep.subr.mxu0 0.0
    %521 = vmatpush1.msra.mxu0 0.0
    %522 = vmatprep.subr.mxu0 0.0
    %523 = vmatpush1.msra.mxu0 0.0
    %524 = vmatprep.subr.mxu0 0.0
    %525 = vmatpush1.msra.mxu0 0.0
    %526 = vmatprep.subr.mxu0 0.0
    %527 = vmatpush1.msra.mxu0 0.0
    %528 = vmatprep.subr.mxu0 0.0
    %529 = vmatpush1.msra.mxu0 0.0
    %530 = vmatprep.subr.mxu0 0.0
    %531 = vmatpush1.msra.mxu0 0.0
    %532 = vmatprep.subr.mxu0 0.0
    %533 = vmatpush1.msra.mxu0 0.0
    %534 = vmatprep.subr.mxu0 0.0
    %535 = vmatpush1.msra.mxu0 0.0
    %536 = vmatprep.subr.mxu0 0.0
    %537 = vmatpush1.msra.mxu0 0.0
    %538 = vmatprep.subr.mxu0 0.0
    %539 = vmatpush1.msra.mxu0 0.0
    %540 = vmatprep.mubr.f32.mxu0 0.0
    %541 = vmatmul.mubr.f32.gmra.mrb[0].mxu0 %v474
    %v542 = vpop.f32.mrb[0].mxu0
    %v543 = vadd.f32 0.0, %v542
    %v544 = vpop.f32.mrb[0].mxu0
    %545 = vdwg.mxu0
    %v546 = vadd.f32 %v473, %v543
    %v547 = vxor.u32 %v546, 2147483648
    %v548 = vmul.f32 %v547, 1.442695
    %v549 = vpow.pop %v548
    %v550 = vadd.f32 %v549, 1.0
    %v551 = vrcp.pop %v550
    %v552 = vmul.f32 1.0, %v551
    %v553 = vtanh.pop %v546
    %v554 = vmul.f32 %v552, %v357
    %556 = vrot.lane.b32.xlu0 %v553, 64
    %v557 = vpop.permute.xlu0 %556
    %v559 = vmul.f32 %v552, %v557
    %561 = vrot.lane.b32.xlu0 %v559, 32
    %v562 = vpop.permute.xlu0 %561
    %v564 = vadd.f32 %v554, %v562
    %v565 = vtanh.pop %v564
    %567 = vrot.lane.b32.xlu0 %v565, 64
    %v568 = vpop.permute.xlu0 %567
    %v570 = vmul.f32 %v552, %v568
    %572 = vrot.lane.b32.xlu0 %v570, 32
    %v573 = vpop.permute.xlu0 %572
    %575 = vst.msk [vmem:[#allocation2] sm:$0x3] %vm162, %v573
    %577 = vrot.lane.b32.xlu0 %v471, 64
    %v578 = vpop.permute.xlu0 %577
    %580 = vst.msk [vmem:[#allocation2] sm:$0x3] %vm164, %v578
    %v581 = vld [vmem:[#allocation2] sm:$0x3]
    %v583 = vsel %vm167, %v581, 0
    %585 = vmatprep.subr.mxu0 0.0
    %586 = vmatpush1.msra.mxu0 %v43
    %587 = vmatprep.subr.mxu0 0.0
    %588 = vmatpush1.msra.mxu0 %v44
    %589 = vmatprep.subr.mxu0 0.0
    %590 = vmatpush1.msra.mxu0 %v45
    %591 = vmatprep.subr.mxu0 0.0
    %592 = vmatpush1.msra.mxu0 %v46
    %593 = vmatprep.subr.mxu0 0.0
    %594 = vmatpush1.msra.mxu0 %v47
    %595 = vmatprep.subr.mxu0 0.0
    %596 = vmatpush1.msra.mxu0 %v48
    %597 = vmatprep.subr.mxu0 0.0
    %598 = vmatpush1.msra.mxu0 %v49
    %599 = vmatprep.subr.mxu0 0.0
    %600 = vmatpush1.msra.mxu0 %v50
    %601 = vmatprep.subr.mxu0 0.0
    %602 = vmatpush1.msra.mxu0 0.0
    %603 = vmatprep.subr.mxu0 0.0
    %604 = vmatpush1.msra.mxu0 0.0
    %605 = vmatprep.subr.mxu0 0.0
    %606 = vmatpush1.msra.mxu0 0.0
    %607 = vmatprep.subr.mxu0 0.0
    %608 = vmatpush1.msra.mxu0 0.0
    %609 = vmatprep.subr.mxu0 0.0
    %610 = vmatpush1.msra.mxu0 0.0
    %611 = vmatprep.subr.mxu0 0.0
    %612 = vmatpush1.msra.mxu0 0.0
    %613 = vmatprep.subr.mxu0 0.0
    %614 = vmatpush1.msra.mxu0 0.0
    %615 = vmatprep.subr.mxu0 0.0
    %616 = vmatpush1.msra.mxu0 0.0
    %617 = vmatprep.subr.mxu0 0.0
    %618 = vmatpush1.msra.mxu0 0.0
    %619 = vmatprep.subr.mxu0 0.0
    %620 = vmatpush1.msra.mxu0 0.0
    %621 = vmatprep.subr.mxu0 0.0
    %622 = vmatpush1.msra.mxu0 0.0
    %623 = vmatprep.subr.mxu0 0.0
    %624 = vmatpush1.msra.mxu0 0.0
    %625 = vmatprep.subr.mxu0 0.0
    %626 = vmatpush1.msra.mxu0 0.0
    %627 = vmatprep.subr.mxu0 0.0
    %628 = vmatpush1.msra.mxu0 0.0
    %629 = vmatprep.subr.mxu0 0.0
    %630 = vmatpush1.msra.mxu0 0.0
    %631 = vmatprep.subr.mxu0 0.0
    %632 = vmatpush1.msra.mxu0 0.0
    %633 = vmatprep.subr.mxu0 0.0
    %634 = vmatpush1.msra.mxu0 0.0
    %635 = vmatprep.subr.mxu0 0.0
    %636 = vmatpush1.msra.mxu0 0.0
    %637 = vmatprep.subr.mxu0 0.0
    %638 = vmatpush1.msra.mxu0 0.0
    %639 = vmatprep.subr.mxu0 0.0
    %640 = vmatpush1.msra.mxu0 0.0
    %641 = vmatprep.subr.mxu0 0.0
    %642 = vmatpush1.msra.mxu0 0.0
    %643 = vmatprep.subr.mxu0 0.0
    %644 = vmatpush1.msra.mxu0 0.0
    %645 = vmatprep.subr.mxu0 0.0
    %646 = vmatpush1.msra.mxu0 0.0
    %647 = vmatprep.subr.mxu0 0.0
    %648 = vmatpush1.msra.mxu0 0.0
    %649 = vmatprep.mubr.f32.mxu0 0.0
    %650 = vmatmul.mubr.f32.gmra.mrb[0].mxu0 %v583
    %v651 = vpop.f32.mrb[0].mxu0
    %v652 = vadd.f32 %v56, %v651
    %v653 = vpop.f32.mrb[0].mxu0
    %654 = vdwg.mxu0
    %v655 = vxor.u32 %v652, 2147483648
    %v656 = vmul.f32 %v655, 1.442695
    %v657 = vpow.pop %v656
    %v658 = vadd.f32 %v657, 1.0
    %v659 = vrcp.pop %v658
    %v660 = vmul.f32 1.0, %v659
    %v661 = vtanh.pop %v652
    %v662 = vmul.f32 %v660, %v465
    %664 = vrot.lane.b32.xlu0 %v661, 64
    %v665 = vpop.permute.xlu0 %664
    %v667 = vmul.f32 %v660, %v665
    %669 = vrot.lane.b32.xlu0 %v667, 32
    %v670 = vpop.permute.xlu0 %669
    %v672 = vadd.f32 %v662, %v670
    %v673 = vtanh.pop %v672
    %675 = vrot.lane.b32.xlu0 %v673, 64
    %v676 = vpop.permute.xlu0 %675
    %v678 = vmul.f32 %v660, %v676
    %s679 = scalar_lea.vmem %s0, 6
    %v680 = vld [vmem:[%s679] sm:$0x3]
    %v681 = vsel %vm59, %v573, 0
    %683 = vmatprep.subr.mxu0 0.0
    %684 = vmatpush1.msra.mxu0 %v39
    %685 = vmatprep.subr.mxu0 0.0
    %686 = vmatpush1.msra.mxu0 %v40
    %687 = vmatprep.subr.mxu0 0.0
    %688 = vmatpush1.msra.mxu0 %v41
    %689 = vmatprep.subr.mxu0 0.0
    %690 = vmatpush1.msra.mxu0 %v42
    %691 = vmatprep.subr.mxu0 0.0
    %692 = vmatpush1.msra.mxu0 0.0
    %693 = vmatprep.subr.mxu0 0.0
    %694 = vmatpush1.msra.mxu0 0.0
    %695 = vmatprep.subr.mxu0 0.0
    %696 = vmatpush1.msra.mxu0 0.0
    %697 = vmatprep.subr.mxu0 0.0
    %698 = vmatpush1.msra.mxu0 0.0
    %699 = vmatprep.subr.mxu0 0.0
    %700 = vmatpush1.msra.mxu0 0.0
    %701 = vmatprep.subr.mxu0 0.0
    %702 = vmatpush1.msra.mxu0 0.0
    %703 = vmatprep.subr.mxu0 0.0
    %704 = vmatpush1.msra.mxu0 0.0
    %705 = vmatprep.subr.mxu0 0.0
    %706 = vmatpush1.msra.mxu0 0.0
    %707 = vmatprep.subr.mxu0 0.0
    %708 = vmatpush1.msra.mxu0 0.0
    %709 = vmatprep.subr.mxu0 0.0
    %710 = vmatpush1.msra.mxu0 0.0
    %711 = vmatprep.subr.mxu0 0.0
    %712 = vmatpush1.msra.mxu0 0.0
    %713 = vmatprep.subr.mxu0 0.0
    %714 = vmatpush1.msra.mxu0 0.0
    %715 = vmatprep.subr.mxu0 0.0
    %716 = vmatpush1.msra.mxu0 0.0
    %717 = vmatprep.subr.mxu0 0.0
    %718 = vmatpush1.msra.mxu0 0.0
    %719 = vmatprep.subr.mxu0 0.0
    %720 = vmatpush1.msra.mxu0 0.0
    %721 = vmatprep.subr.mxu0 0.0
    %722 = vmatpush1.msra.mxu0 0.0
    %723 = vmatprep.subr.mxu0 0.0
    %724 = vmatpush1.msra.mxu0 0.0
    %725 = vmatprep.subr.mxu0 0.0
    %726 = vmatpush1.msra.mxu0 0.0
    %727 = vmatprep.subr.mxu0 0.0
    %728 = vmatpush1.msra.mxu0 0.0
    %729 = vmatprep.subr.mxu0 0.0
    %730 = vmatpush1.msra.mxu0 0.0
    %731 = vmatprep.subr.mxu0 0.0
    %732 = vmatpush1.msra.mxu0 0.0
    %733 = vmatprep.subr.mxu0 0.0
    %734 = vmatpush1.msra.mxu0 0.0
    %735 = vmatprep.subr.mxu0 0.0
    %736 = vmatpush1.msra.mxu0 0.0
    %737 = vmatprep.subr.mxu0 0.0
    %738 = vmatpush1.msra.mxu0 0.0
    %739 = vmatprep.subr.mxu0 0.0
    %740 = vmatpush1.msra.mxu0 0.0
    %741 = vmatprep.subr.mxu0 0.0
    %742 = vmatpush1.msra.mxu0 0.0
    %743 = vmatprep.subr.mxu0 0.0
    %744 = vmatpush1.msra.mxu0 0.0
    %745 = vmatprep.subr.mxu0 0.0
    %746 = vmatpush1.msra.mxu0 0.0
    %747 = vmatprep.mubr.f32.mxu0 0.0
    %748 = vmatmul.mubr.f32.gmra.mrb[0].mxu0 %v681
    %v749 = vpop.f32.mrb[0].mxu0
    %v750 = vadd.f32 0.0, %v749
    %v751 = vpop.f32.mrb[0].mxu0
    %752 = vdwg.mxu0
    %v753 = vadd.f32 %v680, %v750
    %v754 = vxor.u32 %v753, 2147483648
    %v755 = vmul.f32 %v754, 1.442695
    %v756 = vpow.pop %v755
    %v757 = vadd.f32 %v756, 1.0
    %v758 = vrcp.pop %v757
    %v759 = vmul.f32 1.0, %v758
    %v760 = vtanh.pop %v753
    %v761 = vmul.f32 %v759, %v564
    %763 = vrot.lane.b32.xlu0 %v760, 64
    %v764 = vpop.permute.xlu0 %763
    %v766 = vmul.f32 %v759, %v764
    %768 = vrot.lane.b32.xlu0 %v766, 32
    %v769 = vpop.permute.xlu0 %768
    %v771 = vadd.f32 %v761, %v769
    %v772 = vtanh.pop %v771
    %774 = vrot.lane.b32.xlu0 %v772, 64
    %v775 = vpop.permute.xlu0 %774
    %v777 = vmul.f32 %v759, %v775
    %779 = vrot.lane.b32.xlu0 %v777, 32
    %v780 = vpop.permute.xlu0 %779
    %782 = vst.msk [vmem:[#allocation2] sm:$0x3] %vm162, %v780
    %784 = vrot.lane.b32.xlu0 %v678, 64
    %v785 = vpop.permute.xlu0 %784
    %787 = vst.msk [vmem:[#allocation2] sm:$0x3] %vm164, %v785
    %v788 = vld [vmem:[#allocation2] sm:$0x3]
    %v790 = vsel %vm167, %v788, 0
    %792 = vmatprep.subr.mxu0 0.0
    %793 = vmatpush1.msra.mxu0 %v43
    %794 = vmatprep.subr.mxu0 0.0
    %795 = vmatpush1.msra.mxu0 %v44
    %796 = vmatprep.subr.mxu0 0.0
    %797 = vmatpush1.msra.mxu0 %v45
    %798 = vmatprep.subr.mxu0 0.0
    %799 = vmatpush1.msra.mxu0 %v46
    %800 = vmatprep.subr.mxu0 0.0
    %801 = vmatpush1.msra.mxu0 %v47
    %802 = vmatprep.subr.mxu0 0.0
    %803 = vmatpush1.msra.mxu0 %v48
    %804 = vmatprep.subr.mxu0 0.0
    %805 = vmatpush1.msra.mxu0 %v49
    %806 = vmatprep.subr.mxu0 0.0
    %807 = vmatpush1.msra.mxu0 %v50
    %808 = vmatprep.subr.mxu0 0.0
    %809 = vmatpush1.msra.mxu0 0.0
    %810 = vmatprep.subr.mxu0 0.0
    %811 = vmatpush1.msra.mxu0 0.0
    %812 = vmatprep.subr.mxu0 0.0
    %813 = vmatpush1.msra.mxu0 0.0
    %814 = vmatprep.subr.mxu0 0.0
    %815 = vmatpush1.msra.mxu0 0.0
    %816 = vmatprep.subr.mxu0 0.0
    %817 = vmatpush1.msra.mxu0 0.0
    %818 = vmatprep.subr.mxu0 0.0
    %819 = vmatpush1.msra.mxu0 0.0
    %820 = vmatprep.subr.mxu0 0.0
    %821 = vmatpush1.msra.mxu0 0.0
    %822 = vmatprep.subr.mxu0 0.0
    %823 = vmatpush1.msra.mxu0 0.0
    %824 = vmatprep.subr.mxu0 0.0
    %825 = vmatpush1.msra.mxu0 0.0
    %826 = vmatprep.subr.mxu0 0.0
    %827 = vmatpush1.msra.mxu0 0.0
    %828 = vmatprep.subr.mxu0 0.0
    %829 = vmatpush1.msra.mxu0 0.0
    %830 = vmatprep.subr.mxu0 0.0
    %831 = vmatpush1.msra.mxu0 0.0
    %832 = vmatprep.subr.mxu0 0.0
    %833 = vmatpush1.msra.mxu0 0.0
    %834 = vmatprep.subr.mxu0 0.0
    %835 = vmatpush1.msra.mxu0 0.0
    %836 = vmatprep.subr.mxu0 0.0
    %837 = vmatpush1.msra.mxu0 0.0
    %838 = vmatprep.subr.mxu0 0.0
    %839 = vmatpush1.msra.mxu0 0.0
    %840 = vmatprep.subr.mxu0 0.0
    %841 = vmatpush1.msra.mxu0 0.0
    %842 = vmatprep.subr.mxu0 0.0
    %843 = vmatpush1.msra.mxu0 0.0
    %844 = vmatprep.subr.mxu0 0.0
    %845 = vmatpush1.msra.mxu0 0.0
    %846 = vmatprep.subr.mxu0 0.0
    %847 = vmatpush1.msra.mxu0 0.0
    %848 = vmatprep.subr.mxu0 0.0
    %849 = vmatpush1.msra.mxu0 0.0
    %850 = vmatprep.subr.mxu0 0.0
    %851 = vmatpush1.msra.mxu0 0.0
    %852 = vmatprep.subr.mxu0 0.0
    %853 = vmatpush1.msra.mxu0 0.0
    %854 = vmatprep.subr.mxu0 0.0
    %855 = vmatpush1.msra.mxu0 0.0
    %856 = vmatprep.mubr.f32.mxu0 0.0
    %857 = vmatmul.mubr.f32.gmra.mrb[0].mxu0 %v790
    %v858 = vpop.f32.mrb[0].mxu0
    %v859 = vadd.f32 %v56, %v858
    %v860 = vpop.f32.mrb[0].mxu0
    %861 = vdwg.mxu0
    %v862 = vxor.u32 %v859, 2147483648
    %v863 = vmul.f32 %v862, 1.442695
    %v864 = vpow.pop %v863
    %v865 = vadd.f32 %v864, 1.0
    %v866 = vrcp.pop %v865
    %v867 = vmul.f32 1.0, %v866
    %v868 = vtanh.pop %v859
    %v869 = vmul.f32 %v867, %v672
    %871 = vrot.lane.b32.xlu0 %v868, 64
    %v872 = vpop.permute.xlu0 %871
    %v874 = vmul.f32 %v867, %v872
    %876 = vrot.lane.b32.xlu0 %v874, 32
    %v877 = vpop.permute.xlu0 %876
    %v879 = vadd.f32 %v869, %v877
    %v880 = vtanh.pop %v879
    %882 = vrot.lane.b32.xlu0 %v880, 64
    %v883 = vpop.permute.xlu0 %882
    %v885 = vmul.f32 %v867, %v883
    %s886 = scalar_lea.vmem %s0, 8
    %v887 = vld [vmem:[%s886] sm:$0x3]
    %v888 = vsel %vm59, %v780, 0
    %890 = vmatprep.subr.mxu0 0.0
    %891 = vmatpush1.msra.mxu0 %v39
    %892 = vmatprep.subr.mxu0 0.0
    %893 = vmatpush1.msra.mxu0 %v40
    %894 = vmatprep.subr.mxu0 0.0
    %895 = vmatpush1.msra.mxu0 %v41
    %896 = vmatprep.subr.mxu0 0.0
    %897 = vmatpush1.msra.mxu0 %v42
    %898 = vmatprep.subr.mxu0 0.0
    %899 = vmatpush1.msra.mxu0 0.0
    %900 = vmatprep.subr.mxu0 0.0
    %901 = vmatpush1.msra.mxu0 0.0
    %902 = vmatprep.subr.mxu0 0.0
    %903 = vmatpush1.msra.mxu0 0.0
    %904 = vmatprep.subr.mxu0 0.0
    %905 = vmatpush1.msra.mxu0 0.0
    %906 = vmatprep.subr.mxu0 0.0
    %907 = vmatpush1.msra.mxu0 0.0
    %908 = vmatprep.subr.mxu0 0.0
    %909 = vmatpush1.msra.mxu0 0.0
    %910 = vmatprep.subr.mxu0 0.0
    %911 = vmatpush1.msra.mxu0 0.0
    %912 = vmatprep.subr.mxu0 0.0
    %913 = vmatpush1.msra.mxu0 0.0
    %914 = vmatprep.subr.mxu0 0.0
    %915 = vmatpush1.msra.mxu0 0.0
    %916 = vmatprep.subr.mxu0 0.0
    %917 = vmatpush1.msra.mxu0 0.0
    %918 = vmatprep.subr.mxu0 0.0
    %919 = vmatpush1.msra.mxu0 0.0
    %920 = vmatprep.subr.mxu0 0.0
    %921 = vmatpush1.msra.mxu0 0.0
    %922 = vmatprep.subr.mxu0 0.0
    %923 = vmatpush1.msra.mxu0 0.0
    %924 = vmatprep.subr.mxu0 0.0
    %925 = vmatpush1.msra.mxu0 0.0
    %926 = vmatprep.subr.mxu0 0.0
    %927 = vmatpush1.msra.mxu0 0.0
    %928 = vmatprep.subr.mxu0 0.0
    %929 = vmatpush1.msra.mxu0 0.0
    %930 = vmatprep.subr.mxu0 0.0
    %931 = vmatpush1.msra.mxu0 0.0
    %932 = vmatprep.subr.mxu0 0.0
    %933 = vmatpush1.msra.mxu0 0.0
    %934 = vmatprep.subr.mxu0 0.0
    %935 = vmatpush1.msra.mxu0 0.0
    %936 = vmatprep.subr.mxu0 0.0
    %937 = vmatpush1.msra.mxu0 0.0
    %938 = vmatprep.subr.mxu0 0.0
    %939 = vmatpush1.msra.mxu0 0.0
    %940 = vmatprep.subr.mxu0 0.0
    %941 = vmatpush1.msra.mxu0 0.0
    %942 = vmatprep.subr.mxu0 0.0
    %943 = vmatpush1.msra.mxu0 0.0
    %944 = vmatprep.subr.mxu0 0.0
    %945 = vmatpush1.msra.mxu0 0.0
    %946 = vmatprep.subr.mxu0 0.0
    %947 = vmatpush1.msra.mxu0 0.0
    %948 = vmatprep.subr.mxu0 0.0
    %949 = vmatpush1.msra.mxu0 0.0
    %950 = vmatprep.subr.mxu0 0.0
    %951 = vmatpush1.msra.mxu0 0.0
    %952 = vmatprep.subr.mxu0 0.0
    %953 = vmatpush1.msra.mxu0 0.0
    %954 = vmatprep.mubr.f32.mxu0 0.0
    %955 = vmatmul.mubr.f32.gmra.mrb[0].mxu0 %v888
    %v956 = vpop.f32.mrb[0].mxu0
    %v957 = vadd.f32 0.0, %v956
    %v958 = vpop.f32.mrb[0].mxu0
    %959 = vdwg.mxu0
    %v960 = vadd.f32 %v887, %v957
    %v961 = vxor.u32 %v960, 2147483648
    %v962 = vmul.f32 %v961, 1.442695
    %v963 = vpow.pop %v962
    %v964 = vadd.f32 %v963, 1.0
    %v965 = vrcp.pop %v964
    %v966 = vmul.f32 1.0, %v965
    %v967 = vtanh.pop %v960
    %v968 = vmul.f32 %v966, %v771
    %970 = vrot.lane.b32.xlu0 %v967, 64
    %v971 = vpop.permute.xlu0 %970
    %v973 = vmul.f32 %v966, %v971
    %975 = vrot.lane.b32.xlu0 %v973, 32
    %v976 = vpop.permute.xlu0 %975
    %v978 = vadd.f32 %v968, %v976
    %v979 = vtanh.pop %v978
    %981 = vrot.lane.b32.xlu0 %v979, 64
    %v982 = vpop.permute.xlu0 %981
    %v984 = vmul.f32 %v966, %v982
    %986 = vrot.lane.b32.xlu0 %v984, 32
    %v987 = vpop.permute.xlu0 %986
    %989 = vst.msk [vmem:[#allocation2] sm:$0x3] %vm162, %v987
    %991 = vrot.lane.b32.xlu0 %v885, 64
    %v992 = vpop.permute.xlu0 %991
    %994 = vst.msk [vmem:[#allocation2] sm:$0x3] %vm164, %v992
    %v995 = vld [vmem:[#allocation2] sm:$0x3]
    %v997 = vsel %vm167, %v995, 0
    %999 = vmatprep.subr.mxu0 0.0
    %1000 = vmatpush1.msra.mxu0 %v43
    %1001 = vmatprep.subr.mxu0 0.0
    %1002 = vmatpush1.msra.mxu0 %v44
    %1003 = vmatprep.subr.mxu0 0.0
    %1004 = vmatpush1.msra.mxu0 %v45
    %1005 = vmatprep.subr.mxu0 0.0
    %1006 = vmatpush1.msra.mxu0 %v46
    %1007 = vmatprep.subr.mxu0 0.0
    %1008 = vmatpush1.msra.mxu0 %v47
    %1009 = vmatprep.subr.mxu0 0.0
    %1010 = vmatpush1.msra.mxu0 %v48
    %1011 = vmatprep.subr.mxu0 0.0
    %1012 = vmatpush1.msra.mxu0 %v49
    %1013 = vmatprep.subr.mxu0 0.0
    %1014 = vmatpush1.msra.mxu0 %v50
    %1015 = vmatprep.subr.mxu0 0.0
    %1016 = vmatpush1.msra.mxu0 0.0
    %1017 = vmatprep.subr.mxu0 0.0
    %1018 = vmatpush1.msra.mxu0 0.0
    %1019 = vmatprep.subr.mxu0 0.0
    %1020 = vmatpush1.msra.mxu0 0.0
    %1021 = vmatprep.subr.mxu0 0.0
    %1022 = vmatpush1.msra.mxu0 0.0
    %1023 = vmatprep.subr.mxu0 0.0
    %1024 = vmatpush1.msra.mxu0 0.0
    %1025 = vmatprep.subr.mxu0 0.0
    %1026 = vmatpush1.msra.mxu0 0.0
    %1027 = vmatprep.subr.mxu0 0.0
    %1028 = vmatpush1.msra.mxu0 0.0
    %1029 = vmatprep.subr.mxu0 0.0
    %1030 = vmatpush1.msra.mxu0 0.0
    %1031 = vmatprep.subr.mxu0 0.0
    %1032 = vmatpush1.msra.mxu0 0.0
    %1033 = vmatprep.subr.mxu0 0.0
    %1034 = vmatpush1.msra.mxu0 0.0
    %1035 = vmatprep.subr.mxu0 0.0
    %1036 = vmatpush1.msra.mxu0 0.0
    %1037 = vmatprep.subr.mxu0 0.0
    %1038 = vmatpush1.msra.mxu0 0.0
    %1039 = vmatprep.subr.mxu0 0.0
    %1040 = vmatpush1.msra.mxu0 0.0
    %1041 = vmatprep.subr.mxu0 0.0
    %1042 = vmatpush1.msra.mxu0 0.0
    %1043 = vmatprep.subr.mxu0 0.0
    %1044 = vmatpush1.msra.mxu0 0.0
    %1045 = vmatprep.subr.mxu0 0.0
    %1046 = vmatpush1.msra.mxu0 0.0
    %1047 = vmatprep.subr.mxu0 0.0
    %1048 = vmatpush1.msra.mxu0 0.0
    %1049 = vmatprep.subr.mxu0 0.0
    %1050 = vmatpush1.msra.mxu0 0.0
    %1051 = vmatprep.subr.mxu0 0.0
    %1052 = vmatpush1.msra.mxu0 0.0
    %1053 = vmatprep.subr.mxu0 0.0
    %1054 = vmatpush1.msra.mxu0 0.0
    %1055 = vmatprep.subr.mxu0 0.0
    %1056 = vmatpush1.msra.mxu0 0.0
    %1057 = vmatprep.subr.mxu0 0.0
    %1058 = vmatpush1.msra.mxu0 0.0
    %1059 = vmatprep.subr.mxu0 0.0
    %1060 = vmatpush1.msra.mxu0 0.0
    %1061 = vmatprep.subr.mxu0 0.0
    %1062 = vmatpush1.msra.mxu0 0.0
    %1063 = vmatprep.mubr.f32.mxu0 0.0
    %1064 = vmatmul.mubr.f32.gmra.mrb[0].mxu0 %v997
    %v1065 = vpop.f32.mrb[0].mxu0
    %v1066 = vadd.f32 %v56, %v1065
    %v1067 = vpop.f32.mrb[0].mxu0
    %1068 = vdwg.mxu0
    %v1069 = vxor.u32 %v1066, 2147483648
    %v1070 = vmul.f32 %v1069, 1.442695
    %v1071 = vpow.pop %v1070
    %v1072 = vadd.f32 %v1071, 1.0
    %v1073 = vrcp.pop %v1072
    %v1074 = vmul.f32 1.0, %v1073
    %v1075 = vtanh.pop %v1066
    %v1076 = vmul.f32 %v1074, %v879
    %1078 = vrot.lane.b32.xlu0 %v1075, 64
    %v1079 = vpop.permute.xlu0 %1078
    %v1081 = vmul.f32 %v1074, %v1079
    %1083 = vrot.lane.b32.xlu0 %v1081, 32
    %v1084 = vpop.permute.xlu0 %1083
    %v1086 = vadd.f32 %v1076, %v1084
    %v1087 = vtanh.pop %v1086
    %1089 = vrot.lane.b32.xlu0 %v1087, 64
    %v1090 = vpop.permute.xlu0 %1089
    %v1092 = vmul.f32 %v1074, %v1090
    %s1093 = scalar_lea.vmem %s0, 10
    %v1094 = vld [vmem:[%s1093] sm:$0x3]
    %v1095 = vsel %vm59, %v987, 0
    %1097 = vmatprep.subr.mxu0 0.0
    %1098 = vmatpush1.msra.mxu0 %v39
    %1099 = vmatprep.subr.mxu0 0.0
    %1100 = vmatpush1.msra.mxu0 %v40
    %1101 = vmatprep.subr.mxu0 0.0
    %1102 = vmatpush1.msra.mxu0 %v41
    %1103 = vmatprep.subr.mxu0 0.0
    %1104 = vmatpush1.msra.mxu0 %v42
    %1105 = vmatprep.subr.mxu0 0.0
    %1106 = vmatpush1.msra.mxu0 0.0
    %1107 = vmatprep.subr.mxu0 0.0
    %1108 = vmatpush1.msra.mxu0 0.0
    %1109 = vmatprep.subr.mxu0 0.0
    %1110 = vmatpush1.msra.mxu0 0.0
    %1111 = vmatprep.subr.mxu0 0.0
    %1112 = vmatpush1.msra.mxu0 0.0
    %1113 = vmatprep.subr.mxu0 0.0
    %1114 = vmatpush1.msra.mxu0 0.0
    %1115 = vmatprep.subr.mxu0 0.0
    %1116 = vmatpush1.msra.mxu0 0.0
    %1117 = vmatprep.subr.mxu0 0.0
    %1118 = vmatpush1.msra.mxu0 0.0
    %1119 = vmatprep.subr.mxu0 0.0
    %1120 = vmatpush1.msra.mxu0 0.0
    %1121 = vmatprep.subr.mxu0 0.0
    %1122 = vmatpush1.msra.mxu0 0.0
    %1123 = vmatprep.subr.mxu0 0.0
    %1124 = vmatpush1.msra.mxu0 0.0
    %1125 = vmatprep.subr.mxu0 0.0
    %1126 = vmatpush1.msra.mxu0 0.0
    %1127 = vmatprep.subr.mxu0 0.0
    %1128 = vmatpush1.msra.mxu0 0.0
    %1129 = vmatprep.subr.mxu0 0.0
    %1130 = vmatpush1.msra.mxu0 0.0
    %1131 = vmatprep.subr.mxu0 0.0
    %1132 = vmatpush1.msra.mxu0 0.0
    %1133 = vmatprep.subr.mxu0 0.0
    %1134 = vmatpush1.msra.mxu0 0.0
    %1135 = vmatprep.subr.mxu0 0.0
    %1136 = vmatpush1.msra.mxu0 0.0
    %1137 = vmatprep.subr.mxu0 0.0
    %1138 = vmatpush1.msra.mxu0 0.0
    %1139 = vmatprep.subr.mxu0 0.0
    %1140 = vmatpush1.msra.mxu0 0.0
    %1141 = vmatprep.subr.mxu0 0.0
    %1142 = vmatpush1.msra.mxu0 0.0
    %1143 = vmatprep.subr.mxu0 0.0
    %1144 = vmatpush1.msra.mxu0 0.0
    %1145 = vmatprep.subr.mxu0 0.0
    %1146 = vmatpush1.msra.mxu0 0.0
    %1147 = vmatprep.subr.mxu0 0.0
    %1148 = vmatpush1.msra.mxu0 0.0
    %1149 = vmatprep.subr.mxu0 0.0
    %1150 = vmatpush1.msra.mxu0 0.0
    %1151 = vmatprep.subr.mxu0 0.0
    %1152 = vmatpush1.msra.mxu0 0.0
    %1153 = vmatprep.subr.mxu0 0.0
    %1154 = vmatpush1.msra.mxu0 0.0
    %1155 = vmatprep.subr.mxu0 0.0
    %1156 = vmatpush1.msra.mxu0 0.0
    %1157 = vmatprep.subr.mxu0 0.0
    %1158 = vmatpush1.msra.mxu0 0.0
    %1159 = vmatprep.subr.mxu0 0.0
    %1160 = vmatpush1.msra.mxu0 0.0
    %1161 = vmatprep.mubr.f32.mxu0 0.0
    %1162 = vmatmul.mubr.f32.gmra.mrb[0].mxu0 %v1095
    %v1163 = vpop.f32.mrb[0].mxu0
    %v1164 = vadd.f32 0.0, %v1163
    %v1165 = vpop.f32.mrb[0].mxu0
    %1166 = vdwg.mxu0
    %v1167 = vadd.f32 %v1094, %v1164
    %v1168 = vxor.u32 %v1167, 2147483648
    %v1169 = vmul.f32 %v1168, 1.442695
    %v1170 = vpow.pop %v1169
    %v1171 = vadd.f32 %v1170, 1.0
    %v1172 = vrcp.pop %v1171
    %v1173 = vmul.f32 1.0, %v1172
    %v1174 = vtanh.pop %v1167
    %v1175 = vmul.f32 %v1173, %v978
    %1177 = vrot.lane.b32.xlu0 %v1174, 64
    %v1178 = vpop.permute.xlu0 %1177
    %v1180 = vmul.f32 %v1173, %v1178
    %1182 = vrot.lane.b32.xlu0 %v1180, 32
    %v1183 = vpop.permute.xlu0 %1182
    %v1185 = vadd.f32 %v1175, %v1183
    %v1186 = vtanh.pop %v1185
    %1188 = vrot.lane.b32.xlu0 %v1186, 64
    %v1189 = vpop.permute.xlu0 %1188
    %v1191 = vmul.f32 %v1173, %v1189
    %1193 = vrot.lane.b32.xlu0 %v1191, 32
    %v1194 = vpop.permute.xlu0 %1193
    %1196 = vst.msk [vmem:[#allocation2] sm:$0x3] %vm162, %v1194
    %1198 = vrot.lane.b32.xlu0 %v1092, 64
    %v1199 = vpop.permute.xlu0 %1198
    %1201 = vst.msk [vmem:[#allocation2] sm:$0x3] %vm164, %v1199
    %v1202 = vld [vmem:[#allocation2] sm:$0x3]
    %v1204 = vsel %vm167, %v1202, 0
    %1206 = vmatprep.subr.mxu0 0.0
    %1207 = vmatpush1.msra.mxu0 %v43
    %1208 = vmatprep.subr.mxu0 0.0
    %1209 = vmatpush1.msra.mxu0 %v44
    %1210 = vmatprep.subr.mxu0 0.0
    %1211 = vmatpush1.msra.mxu0 %v45
    %1212 = vmatprep.subr.mxu0 0.0
    %1213 = vmatpush1.msra.mxu0 %v46
    %1214 = vmatprep.subr.mxu0 0.0
    %1215 = vmatpush1.msra.mxu0 %v47
    %1216 = vmatprep.subr.mxu0 0.0
    %1217 = vmatpush1.msra.mxu0 %v48
    %1218 = vmatprep.subr.mxu0 0.0
    %1219 = vmatpush1.msra.mxu0 %v49
    %1220 = vmatprep.subr.mxu0 0.0
    %1221 = vmatpush1.msra.mxu0 %v50
    %1222 = vmatprep.subr.mxu0 0.0
    %1223 = vmatpush1.msra.mxu0 0.0
    %1224 = vmatprep.subr.mxu0 0.0
    %1225 = vmatpush1.msra.mxu0 0.0
    %1226 = vmatprep.subr.mxu0 0.0
    %1227 = vmatpush1.msra.mxu0 0.0
    %1228 = vmatprep.subr.mxu0 0.0
    %1229 = vmatpush1.msra.mxu0 0.0
    %1230 = vmatprep.subr.mxu0 0.0
    %1231 = vmatpush1.msra.mxu0 0.0
    %1232 = vmatprep.subr.mxu0 0.0
    %1233 = vmatpush1.msra.mxu0 0.0
    %1234 = vmatprep.subr.mxu0 0.0
    %1235 = vmatpush1.msra.mxu0 0.0
    %1236 = vmatprep.subr.mxu0 0.0
    %1237 = vmatpush1.msra.mxu0 0.0
    %1238 = vmatprep.subr.mxu0 0.0
    %1239 = vmatpush1.msra.mxu0 0.0
    %1240 = vmatprep.subr.mxu0 0.0
    %1241 = vmatpush1.msra.mxu0 0.0
    %1242 = vmatprep.subr.mxu0 0.0
    %1243 = vmatpush1.msra.mxu0 0.0
    %1244 = vmatprep.subr.mxu0 0.0
    %1245 = vmatpush1.msra.mxu0 0.0
    %1246 = vmatprep.subr.mxu0 0.0
    %1247 = vmatpush1.msra.mxu0 0.0
    %1248 = vmatprep.subr.mxu0 0.0
    %1249 = vmatpush1.msra.mxu0 0.0
    %1250 = vmatprep.subr.mxu0 0.0
    %1251 = vmatpush1.msra.mxu0 0.0
    %1252 = vmatprep.subr.mxu0 0.0
    %1253 = vmatpush1.msra.mxu0 0.0
    %1254 = vmatprep.subr.mxu0 0.0
    %1255 = vmatpush1.msra.mxu0 0.0
    %1256 = vmatprep.subr.mxu0 0.0
    %1257 = vmatpush1.msra.mxu0 0.0
    %1258 = vmatprep.subr.mxu0 0.0
    %1259 = vmatpush1.msra.mxu0 0.0
    %1260 = vmatprep.subr.mxu0 0.0
    %1261 = vmatpush1.msra.mxu0 0.0
    %1262 = vmatprep.subr.mxu0 0.0
    %1263 = vmatpush1.msra.mxu0 0.0
    %1264 = vmatprep.subr.mxu0 0.0
    %1265 = vmatpush1.msra.mxu0 0.0
    %1266 = vmatprep.subr.mxu0 0.0
    %1267 = vmatpush1.msra.mxu0 0.0
    %1268 = vmatprep.subr.mxu0 0.0
    %1269 = vmatpush1.msra.mxu0 0.0
    %1270 = vmatprep.mubr.f32.mxu0 0.0
    %1271 = vmatmul.mubr.f32.gmra.mrb[0].mxu0 %v1204
    %v1272 = vpop.f32.mrb[0].mxu0
    %v1273 = vadd.f32 %v56, %v1272
    %v1274 = vpop.f32.mrb[0].mxu0
    %1275 = vdwg.mxu0
    %v1276 = vxor.u32 %v1273, 2147483648
    %v1277 = vmul.f32 %v1276, 1.442695
    %v1278 = vpow.pop %v1277
    %v1279 = vadd.f32 %v1278, 1.0
    %v1280 = vrcp.pop %v1279
    %v1281 = vmul.f32 1.0, %v1280
    %v1282 = vtanh.pop %v1273
    %v1283 = vmul.f32 %v1281, %v1086
    %1285 = vrot.lane.b32.xlu0 %v1282, 64
    %v1286 = vpop.permute.xlu0 %1285
    %v1288 = vmul.f32 %v1281, %v1286
    %1290 = vrot.lane.b32.xlu0 %v1288, 32
    %v1291 = vpop.permute.xlu0 %1290
    %v1293 = vadd.f32 %v1283, %v1291
    %v1294 = vtanh.pop %v1293
    %1296 = vrot.lane.b32.xlu0 %v1294, 64
    %v1297 = vpop.permute.xlu0 %1296
    %v1299 = vmul.f32 %v1281, %v1297
    %s1300 = scalar_lea.vmem %s0, 12
    %v1301 = vld [vmem:[%s1300] sm:$0x3]
    %v1302 = vsel %vm59, %v1194, 0
    %1304 = vmatprep.subr.mxu0 0.0
    %1305 = vmatpush1.msra.mxu0 %v39
    %1306 = vmatprep.subr.mxu0 0.0
    %1307 = vmatpush1.msra.mxu0 %v40
    %1308 = vmatprep.subr.mxu0 0.0
    %1309 = vmatpush1.msra.mxu0 %v41
    %1310 = vmatprep.subr.mxu0 0.0
    %1311 = vmatpush1.msra.mxu0 %v42
    %1312 = vmatprep.subr.mxu0 0.0
    %1313 = vmatpush1.msra.mxu0 0.0
    %1314 = vmatprep.subr.mxu0 0.0
    %1315 = vmatpush1.msra.mxu0 0.0
    %1316 = vmatprep.subr.mxu0 0.0
    %1317 = vmatpush1.msra.mxu0 0.0
    %1318 = vmatprep.subr.mxu0 0.0
    %1319 = vmatpush1.msra.mxu0 0.0
    %1320 = vmatprep.subr.mxu0 0.0
    %1321 = vmatpush1.msra.mxu0 0.0
    %1322 = vmatprep.subr.mxu0 0.0
    %1323 = vmatpush1.msra.mxu0 0.0
    %1324 = vmatprep.subr.mxu0 0.0
    %1325 = vmatpush1.msra.mxu0 0.0
    %1326 = vmatprep.subr.mxu0 0.0
    %1327 = vmatpush1.msra.mxu0 0.0
    %1328 = vmatprep.subr.mxu0 0.0
    %1329 = vmatpush1.msra.mxu0 0.0
    %1330 = vmatprep.subr.mxu0 0.0
    %1331 = vmatpush1.msra.mxu0 0.0
    %1332 = vmatprep.subr.mxu0 0.0
    %1333 = vmatpush1.msra.mxu0 0.0
    %1334 = vmatprep.subr.mxu0 0.0
    %1335 = vmatpush1.msra.mxu0 0.0
    %1336 = vmatprep.subr.mxu0 0.0
    %1337 = vmatpush1.msra.mxu0 0.0
    %1338 = vmatprep.subr.mxu0 0.0
    %1339 = vmatpush1.msra.mxu0 0.0
    %1340 = vmatprep.subr.mxu0 0.0
    %1341 = vmatpush1.msra.mxu0 0.0
    %1342 = vmatprep.subr.mxu0 0.0
    %1343 = vmatpush1.msra.mxu0 0.0
    %1344 = vmatprep.subr.mxu0 0.0
    %1345 = vmatpush1.msra.mxu0 0.0
    %1346 = vmatprep.subr.mxu0 0.0
    %1347 = vmatpush1.msra.mxu0 0.0
    %1348 = vmatprep.subr.mxu0 0.0
    %1349 = vmatpush1.msra.mxu0 0.0
    %1350 = vmatprep.subr.mxu0 0.0
    %1351 = vmatpush1.msra.mxu0 0.0
    %1352 = vmatprep.subr.mxu0 0.0
    %1353 = vmatpush1.msra.mxu0 0.0
    %1354 = vmatprep.subr.mxu0 0.0
    %1355 = vmatpush1.msra.mxu0 0.0
    %1356 = vmatprep.subr.mxu0 0.0
    %1357 = vmatpush1.msra.mxu0 0.0
    %1358 = vmatprep.subr.mxu0 0.0
    %1359 = vmatpush1.msra.mxu0 0.0
    %1360 = vmatprep.subr.mxu0 0.0
    %1361 = vmatpush1.msra.mxu0 0.0
    %1362 = vmatprep.subr.mxu0 0.0
    %1363 = vmatpush1.msra.mxu0 0.0
    %1364 = vmatprep.subr.mxu0 0.0
    %1365 = vmatpush1.msra.mxu0 0.0
    %1366 = vmatprep.subr.mxu0 0.0
    %1367 = vmatpush1.msra.mxu0 0.0
    %1368 = vmatprep.mubr.f32.mxu0 0.0
    %1369 = vmatmul.mubr.f32.gmra.mrb[0].mxu0 %v1302
    %v1370 = vpop.f32.mrb[0].mxu0
    %v1371 = vadd.f32 0.0, %v1370
    %v1372 = vpop.f32.mrb[0].mxu0
    %1373 = vdwg.mxu0
    %v1374 = vadd.f32 %v1301, %v1371
    %v1375 = vxor.u32 %v1374, 2147483648
    %v1376 = vmul.f32 %v1375, 1.442695
    %v1377 = vpow.pop %v1376
    %v1378 = vadd.f32 %v1377, 1.0
    %v1379 = vrcp.pop %v1378
    %v1380 = vmul.f32 1.0, %v1379
    %v1381 = vtanh.pop %v1374
    %v1382 = vmul.f32 %v1380, %v1185
    %1384 = vrot.lane.b32.xlu0 %v1381, 64
    %v1385 = vpop.permute.xlu0 %1384
    %v1387 = vmul.f32 %v1380, %v1385
    %1389 = vrot.lane.b32.xlu0 %v1387, 32
    %v1390 = vpop.permute.xlu0 %1389
    %v1392 = vadd.f32 %v1382, %v1390
    %v1393 = vtanh.pop %v1392
    %1395 = vrot.lane.b32.xlu0 %v1393, 64
    %v1396 = vpop.permute.xlu0 %1395
    %v1398 = vmul.f32 %v1380, %v1396
    %1400 = vrot.lane.b32.xlu0 %v1398, 32
    %v1401 = vpop.permute.xlu0 %1400
    %1403 = vst.msk [vmem:[#allocation2] sm:$0x3] %vm162, %v1401
    %1405 = vrot.lane.b32.xlu0 %v1299, 64
    %v1406 = vpop.permute.xlu0 %1405
    %1408 = vst.msk [vmem:[#allocation2] sm:$0x3] %vm164, %v1406
    %v1409 = vld [vmem:[#allocation2] sm:$0x3]
    %v1411 = vsel %vm167, %v1409, 0
    %1413 = vmatprep.subr.mxu0 0.0
    %1414 = vmatpush1.msra.mxu0 %v43
    %1415 = vmatprep.subr.mxu0 0.0
    %1416 = vmatpush1.msra.mxu0 %v44
    %1417 = vmatprep.subr.mxu0 0.0
    %1418 = vmatpush1.msra.mxu0 %v45
    %1419 = vmatprep.subr.mxu0 0.0
    %1420 = vmatpush1.msra.mxu0 %v46
    %1421 = vmatprep.subr.mxu0 0.0
    %1422 = vmatpush1.msra.mxu0 %v47
    %1423 = vmatprep.subr.mxu0 0.0
    %1424 = vmatpush1.msra.mxu0 %v48
    %1425 = vmatprep.subr.mxu0 0.0
    %1426 = vmatpush1.msra.mxu0 %v49
    %1427 = vmatprep.subr.mxu0 0.0
    %1428 = vmatpush1.msra.mxu0 %v50
    %1429 = vmatprep.subr.mxu0 0.0
    %1430 = vmatpush1.msra.mxu0 0.0
    %1431 = vmatprep.subr.mxu0 0.0
    %1432 = vmatpush1.msra.mxu0 0.0
    %1433 = vmatprep.subr.mxu0 0.0
    %1434 = vmatpush1.msra.mxu0 0.0
    %1435 = vmatprep.subr.mxu0 0.0
    %1436 = vmatpush1.msra.mxu0 0.0
    %1437 = vmatprep.subr.mxu0 0.0
    %1438 = vmatpush1.msra.mxu0 0.0
    %1439 = vmatprep.subr.mxu0 0.0
    %1440 = vmatpush1.msra.mxu0 0.0
    %1441 = vmatprep.subr.mxu0 0.0
    %1442 = vmatpush1.msra.mxu0 0.0
    %1443 = vmatprep.subr.mxu0 0.0
    %1444 = vmatpush1.msra.mxu0 0.0
    %1445 = vmatprep.subr.mxu0 0.0
    %1446 = vmatpush1.msra.mxu0 0.0
    %1447 = vmatprep.subr.mxu0 0.0
    %1448 = vmatpush1.msra.mxu0 0.0
    %1449 = vmatprep.subr.mxu0 0.0
    %1450 = vmatpush1.msra.mxu0 0.0
    %1451 = vmatprep.subr.mxu0 0.0
    %1452 = vmatpush1.msra.mxu0 0.0
    %1453 = vmatprep.subr.mxu0 0.0
    %1454 = vmatpush1.msra.mxu0 0.0
    %1455 = vmatprep.subr.mxu0 0.0
    %1456 = vmatpush1.msra.mxu0 0.0
    %1457 = vmatprep.subr.mxu0 0.0
    %1458 = vmatpush1.msra.mxu0 0.0
    %1459 = vmatprep.subr.mxu0 0.0
    %1460 = vmatpush1.msra.mxu0 0.0
    %1461 = vmatprep.subr.mxu0 0.0
    %1462 = vmatpush1.msra.mxu0 0.0
    %1463 = vmatprep.subr.mxu0 0.0
    %1464 = vmatpush1.msra.mxu0 0.0
    %1465 = vmatprep.subr.mxu0 0.0
    %1466 = vmatpush1.msra.mxu0 0.0
    %1467 = vmatprep.subr.mxu0 0.0
    %1468 = vmatpush1.msra.mxu0 0.0
    %1469 = vmatprep.subr.mxu0 0.0
    %1470 = vmatpush1.msra.mxu0 0.0
    %1471 = vmatprep.subr.mxu0 0.0
    %1472 = vmatpush1.msra.mxu0 0.0
    %1473 = vmatprep.subr.mxu0 0.0
    %1474 = vmatpush1.msra.mxu0 0.0
    %1475 = vmatprep.subr.mxu0 0.0
    %1476 = vmatpush1.msra.mxu0 0.0
    %1477 = vmatprep.mubr.f32.mxu0 0.0
    %1478 = vmatmul.mubr.f32.gmra.mrb[0].mxu0 %v1411
    %v1479 = vpop.f32.mrb[0].mxu0
    %v1480 = vadd.f32 %v56, %v1479
    %v1481 = vpop.f32.mrb[0].mxu0
    %1482 = vdwg.mxu0
    %v1483 = vxor.u32 %v1480, 2147483648
    %v1484 = vmul.f32 %v1483, 1.442695
    %v1485 = vpow.pop %v1484
    %v1486 = vadd.f32 %v1485, 1.0
    %v1487 = vrcp.pop %v1486
    %v1488 = vmul.f32 1.0, %v1487
    %v1489 = vtanh.pop %v1480
    %v1490 = vmul.f32 %v1488, %v1293
    %1492 = vrot.lane.b32.xlu0 %v1489, 64
    %v1493 = vpop.permute.xlu0 %1492
    %v1495 = vmul.f32 %v1488, %v1493
    %1497 = vrot.lane.b32.xlu0 %v1495, 32
    %v1498 = vpop.permute.xlu0 %1497
    %v1500 = vadd.f32 %v1490, %v1498
    %v1501 = vtanh.pop %v1500
    %1503 = vrot.lane.b32.xlu0 %v1501, 64
    %v1504 = vpop.permute.xlu0 %1503
    %v1506 = vmul.f32 %v1488, %v1504
    %s1507 = scalar_lea.vmem %s0, 14
    %v1508 = vld [vmem:[%s1507] sm:$0x3]
    %v1509 = vsel %vm59, %v1401, 0
    %1511 = vmatprep.subr.mxu0 0.0
    %1512 = vmatpush1.msra.mxu0 %v39
    %1513 = vmatprep.subr.mxu0 0.0
    %1514 = vmatpush1.msra.mxu0 %v40
    %1515 = vmatprep.subr.mxu0 0.0
    %1516 = vmatpush1.msra.mxu0 %v41
    %1517 = vmatprep.subr.mxu0 0.0
    %1518 = vmatpush1.msra.mxu0 %v42
    %1519 = vmatprep.subr.mxu0 0.0
    %1520 = vmatpush1.msra.mxu0 0.0
    %1521 = vmatprep.subr.mxu0 0.0
    %1522 = vmatpush1.msra.mxu0 0.0
    %1523 = vmatprep.subr.mxu0 0.0
    %1524 = vmatpush1.msra.mxu0 0.0
    %1525 = vmatprep.subr.mxu0 0.0
    %1526 = vmatpush1.msra.mxu0 0.0
    %1527 = vmatprep.subr.mxu0 0.0
    %1528 = vmatpush1.msra.mxu0 0.0
    %1529 = vmatprep.subr.mxu0 0.0
    %1530 = vmatpush1.msra.mxu0 0.0
    %1531 = vmatprep.subr.mxu0 0.0
    %1532 = vmatpush1.msra.mxu0 0.0
    %1533 = vmatprep.subr.mxu0 0.0
    %1534 = vmatpush1.msra.mxu0 0.0
    %1535 = vmatprep.subr.mxu0 0.0
    %1536 = vmatpush1.msra.mxu0 0.0
    %1537 = vmatprep.subr.mxu0 0.0
    %1538 = vmatpush1.msra.mxu0 0.0
    %1539 = vmatprep.subr.mxu0 0.0
    %1540 = vmatpush1.msra.mxu0 0.0
    %1541 = vmatprep.subr.mxu0 0.0
    %1542 = vmatpush1.msra.mxu0 0.0
    %1543 = vmatprep.subr.mxu0 0.0
    %1544 = vmatpush1.msra.mxu0 0.0
    %1545 = vmatprep.subr.mxu0 0.0
    %1546 = vmatpush1.msra.mxu0 0.0
    %1547 = vmatprep.subr.mxu0 0.0
    %1548 = vmatpush1.msra.mxu0 0.0
    %1549 = vmatprep.subr.mxu0 0.0
    %1550 = vmatpush1.msra.mxu0 0.0
    %1551 = vmatprep.subr.mxu0 0.0
    %1552 = vmatpush1.msra.mxu0 0.0
    %1553 = vmatprep.subr.mxu0 0.0
    %1554 = vmatpush1.msra.mxu0 0.0
    %1555 = vmatprep.subr.mxu0 0.0
    %1556 = vmatpush1.msra.mxu0 0.0
    %1557 = vmatprep.subr.mxu0 0.0
    %1558 = vmatpush1.msra.mxu0 0.0
    %1559 = vmatprep.subr.mxu0 0.0
    %1560 = vmatpush1.msra.mxu0 0.0
    %1561 = vmatprep.subr.mxu0 0.0
    %1562 = vmatpush1.msra.mxu0 0.0
    %1563 = vmatprep.subr.mxu0 0.0
    %1564 = vmatpush1.msra.mxu0 0.0
    %1565 = vmatprep.subr.mxu0 0.0
    %1566 = vmatpush1.msra.mxu0 0.0
    %1567 = vmatprep.subr.mxu0 0.0
    %1568 = vmatpush1.msra.mxu0 0.0
    %1569 = vmatprep.subr.mxu0 0.0
    %1570 = vmatpush1.msra.mxu0 0.0
    %1571 = vmatprep.subr.mxu0 0.0
    %1572 = vmatpush1.msra.mxu0 0.0
    %1573 = vmatprep.subr.mxu0 0.0
    %1574 = vmatpush1.msra.mxu0 0.0
    %1575 = vmatprep.mubr.f32.mxu0 0.0
    %1576 = vmatmul.mubr.f32.gmra.mrb[0].mxu0 %v1509
    %v1577 = vpop.f32.mrb[0].mxu0
    %v1578 = vadd.f32 0.0, %v1577
    %v1579 = vpop.f32.mrb[0].mxu0
    %1580 = vdwg.mxu0
    %v1581 = vadd.f32 %v1508, %v1578
    %v1582 = vxor.u32 %v1581, 2147483648
    %v1583 = vmul.f32 %v1582, 1.442695
    %v1584 = vpow.pop %v1583
    %v1585 = vadd.f32 %v1584, 1.0
    %v1586 = vrcp.pop %v1585
    %v1587 = vmul.f32 1.0, %v1586
    %v1588 = vtanh.pop %v1581
    %v1589 = vmul.f32 %v1587, %v1392
    %1591 = vrot.lane.b32.xlu0 %v1588, 64
    %v1592 = vpop.permute.xlu0 %1591
    %v1594 = vmul.f32 %v1587, %v1592
    %1596 = vrot.lane.b32.xlu0 %v1594, 32
    %v1597 = vpop.permute.xlu0 %1596
    %v1599 = vadd.f32 %v1589, %v1597
    %v1600 = vtanh.pop %v1599
    %1602 = vrot.lane.b32.xlu0 %v1600, 64
    %v1603 = vpop.permute.xlu0 %1602
    %v1605 = vmul.f32 %v1587, %v1603
    %1607 = vrot.lane.b32.xlu0 %v1605, 32
    %v1608 = vpop.permute.xlu0 %1607
    %1610 = vst.msk [vmem:[#allocation2] sm:$0x3] %vm162, %v1608
    %1612 = vrot.lane.b32.xlu0 %v1506, 64
    %v1613 = vpop.permute.xlu0 %1612
    %1615 = vst.msk [vmem:[#allocation2] sm:$0x3] %vm164, %v1613
    %v1616 = vld [vmem:[#allocation2] sm:$0x3]
    %v1618 = vsel %vm167, %v1616, 0
    %1620 = vmatprep.subr.mxu0 0.0
    %1621 = vmatpush1.msra.mxu0 %v43
    %1622 = vmatprep.subr.mxu0 0.0
    %1623 = vmatpush1.msra.mxu0 %v44
    %1624 = vmatprep.subr.mxu0 0.0
    %1625 = vmatpush1.msra.mxu0 %v45
    %1626 = vmatprep.subr.mxu0 0.0
    %1627 = vmatpush1.msra.mxu0 %v46
    %1628 = vmatprep.subr.mxu0 0.0
    %1629 = vmatpush1.msra.mxu0 %v47
    %1630 = vmatprep.subr.mxu0 0.0
    %1631 = vmatpush1.msra.mxu0 %v48
    %1632 = vmatprep.subr.mxu0 0.0
    %1633 = vmatpush1.msra.mxu0 %v49
    %1634 = vmatprep.subr.mxu0 0.0
    %1635 = vmatpush1.msra.mxu0 %v50
    %1636 = vmatprep.subr.mxu0 0.0
    %1637 = vmatpush1.msra.mxu0 0.0
    %1638 = vmatprep.subr.mxu0 0.0
    %1639 = vmatpush1.msra.mxu0 0.0
    %1640 = vmatprep.subr.mxu0 0.0
    %1641 = vmatpush1.msra.mxu0 0.0
    %1642 = vmatprep.subr.mxu0 0.0
    %1643 = vmatpush1.msra.mxu0 0.0
    %1644 = vmatprep.subr.mxu0 0.0
    %1645 = vmatpush1.msra.mxu0 0.0
    %1646 = vmatprep.subr.mxu0 0.0
    %1647 = vmatpush1.msra.mxu0 0.0
    %1648 = vmatprep.subr.mxu0 0.0
    %1649 = vmatpush1.msra.mxu0 0.0
    %1650 = vmatprep.subr.mxu0 0.0
    %1651 = vmatpush1.msra.mxu0 0.0
    %1652 = vmatprep.subr.mxu0 0.0
    %1653 = vmatpush1.msra.mxu0 0.0
    %1654 = vmatprep.subr.mxu0 0.0
    %1655 = vmatpush1.msra.mxu0 0.0
    %1656 = vmatprep.subr.mxu0 0.0
    %1657 = vmatpush1.msra.mxu0 0.0
    %1658 = vmatprep.subr.mxu0 0.0
    %1659 = vmatpush1.msra.mxu0 0.0
    %1660 = vmatprep.subr.mxu0 0.0
    %1661 = vmatpush1.msra.mxu0 0.0
    %1662 = vmatprep.subr.mxu0 0.0
    %1663 = vmatpush1.msra.mxu0 0.0
    %1664 = vmatprep.subr.mxu0 0.0
    %1665 = vmatpush1.msra.mxu0 0.0
    %1666 = vmatprep.subr.mxu0 0.0
    %1667 = vmatpush1.msra.mxu0 0.0
    %1668 = vmatprep.subr.mxu0 0.0
    %1669 = vmatpush1.msra.mxu0 0.0
    %1670 = vmatprep.subr.mxu0 0.0
    %1671 = vmatpush1.msra.mxu0 0.0
    %1672 = vmatprep.subr.mxu0 0.0
    %1673 = vmatpush1.msra.mxu0 0.0
    %1674 = vmatprep.subr.mxu0 0.0
    %1675 = vmatpush1.msra.mxu0 0.0
    %1676 = vmatprep.subr.mxu0 0.0
    %1677 = vmatpush1.msra.mxu0 0.0
    %1678 = vmatprep.subr.mxu0 0.0
    %1679 = vmatpush1.msra.mxu0 0.0
    %1680 = vmatprep.subr.mxu0 0.0
    %1681 = vmatpush1.msra.mxu0 0.0
    %1682 = vmatprep.subr.mxu0 0.0
    %1683 = vmatpush1.msra.mxu0 0.0
    %1684 = vmatprep.mubr.f32.mxu0 0.0
    %1685 = vmatmul.mubr.f32.gmra.mrb[0].mxu0 %v1618
    %v1686 = vpop.f32.mrb[0].mxu0
    %v1687 = vadd.f32 %v56, %v1686
    %v1688 = vpop.f32.mrb[0].mxu0
    %1689 = vdwg.mxu0
    %v1690 = vxor.u32 %v1687, 2147483648
    %v1691 = vmul.f32 %v1690, 1.442695
    %v1692 = vpow.pop %v1691
    %v1693 = vadd.f32 %v1692, 1.0
    %v1694 = vrcp.pop %v1693
    %v1695 = vmul.f32 1.0, %v1694
    %v1696 = vtanh.pop %v1687
    %v1697 = vmul.f32 %v1695, %v1500
    %1699 = vrot.lane.b32.xlu0 %v1696, 64
    %v1700 = vpop.permute.xlu0 %1699
    %v1702 = vmul.f32 %v1695, %v1700
    %1704 = vrot.lane.b32.xlu0 %v1702, 32
    %v1705 = vpop.permute.xlu0 %1704
    %v1707 = vadd.f32 %v1697, %v1705
    %v1708 = vtanh.pop %v1707
    %1710 = vrot.lane.b32.xlu0 %v1708, 64
    %v1711 = vpop.permute.xlu0 %1710
    %v1713 = vmul.f32 %v1695, %v1711
    %v1714 = vld [vmem:[%s4] sm:$0x1]
    %v1716 = vlaneseq
    %v1717 = vshrl.u32 %v1716, 7
    %v1718 = vsub.s32 0, %v1717
    %v1719 = vrot.slane %v1714, %v1718
    %1720 = vrot.lane.b32.xlu0 %v1719, 96
    %v1721 = vpop.permute.xlu0 %1720
    %v1723 = vmul.f32 %v1713, %v1721
    %1725 = vrot.lane.b32.xlu0 %v1723, 32
    %v1726 = vpop.permute.xlu0 %1725
    %v1728 = vsel %vm162, %v1726, 0.0
    %1729 = vadd.xlane.f32.xlu0 %v1728
    %v1730 = vpop.xlane.xlu0 %1729
    %v1731 = vld [vmem:[#allocation3] sm:$0x1]
    %v1733 = vlaneseq
    %v1734 = vshrl.u32 %v1733, 7
    %v1735 = vsub.s32 0, %v1734
    %v1736 = vrot.slane %v1731, %v1735
    %v1738 = vadd.f32 %v1730, %v1736
    %vm1739 = vcmask 1024
    %1740 = vst.msk [vmem:[%s6] sm:$0x3] %vm1739, %v1738
    // Predicated region
    $region30: #{lstm_forward.1} parent=1 // pred_check
      _
    $region31: #{lstm_forward.1} parent=1 // pred_check_branch
      %1742 = sbr.rel (0) target = $region33
    $region32: #{lstm_forward.1} parent=1 // pred_region
      _
    $region33: #{lstm_forward.1} parent=1 // pred_fallthru
      _
    // Predicated region
    $region34: #{lstm_forward.1} parent=1 // pred_check
      _
    $region35: #{lstm_forward.1} parent=1 // pred_check_branch
      %1744 = sbr.rel (0) target = $region37
    $region36: #{lstm_forward.1} parent=1 // pred_region
      _
    $region37: #{lstm_forward.1} parent=1 // pred_fallthru
      _
    %1745 = vsyncpa [#allocation5], 1

</llo_original>
